<compile_context>
chip_gen: v5e
topology: v5e:2x2
jax: 0.10.0
libtpu: 0.0.40
codegen_flags: <defaults>
</compile_context>

<pallas_src>
import functools

import jax
import jax.numpy as jnp
from jax.experimental import pallas as pl
from jax.experimental.pallas import tpu as pltpu

LN_EPS = 1e-5


def _round_up(a, m):
    return ((a + m - 1) // m) * m


def _vmem_budget():
    """Generation-aware VMEM (tile budget, scoped limit) in bytes."""
    cap = 64 << 20                         # v7x-safe default (smallest VMEM)
    try:                                   # 128 MiB on v5e/v6e, 64 MiB on v7x
        cap = int(pltpu.get_tpu_info().vmem_capacity_bytes)
    except Exception:
        pass
    budget = (cap * 7) // 10               # working-set target for tile sizing
    limit = (cap * 17) // 20               # explicit scoped-VMEM limit
    return budget, limit


def _choose_rows(n_rows, width, hidden, x_item, budget):
    """Row-tile size + step count for the (n_rows, width) slab."""
    wp = max(hidden, width)
    # Resident (single-buffered) constants: W1, W2, ones-block, packed params.
    const_bytes = 2 * width * hidden * x_item + width * width * 4 + 4 * wp * 4
    # Per-row VMEM: double-buffered in/out tiles + f32 intermediates (h, y, ...).
    row_bytes = 4 * width * x_item + 4 * (hidden + 4 * width)
    avail = max(budget - const_bytes, 2 << 20)
    tm = max(8, avail // row_bytes)
    # ~2 MiB per x tile: large enough to amortize the ~0.35 us per-grid-step
    # overhead (>=85% of HBM roofline in the measured tile sweep), small
    # enough to keep pipelining slack.
    tm = min(tm, max(256, (2 << 20) // (width * x_item)))

    slab_bytes = n_rows * width * x_item
    if tm >= n_rows:
        if slab_bytes < (2 << 20):
            return n_rows, 1               # one block covering the full array
        # Big single-tile slab: split so the "parallel" grid axis can shard
        # across v7x's two TensorCores.
        tm = _round_up(pl.cdiv(n_rows, 2), 8)
    tm = max(8, (tm // 8) * 8)
    steps = pl.cdiv(n_rows, tm)
    if steps > 1 and steps % 2 == 1:
        # Prefer an even step count (equal work on both TensorCores).
        tm2 = max(8, _round_up(pl.cdiv(n_rows, steps + 1), 8))
        if pl.cdiv(n_rows, tm2) % 2 == 0:
            tm, steps = tm2, pl.cdiv(n_rows, tm2)
    return tm, steps


def _ffn_ln_body(x, w1, w2, b1, b2, gamma, beta, mean_fn, out_dtype):
    # conv_1 / conv_2 are kernel-size-1 Conv1d's == pointwise matmuls.  The
    # operands stay in the activation dtype (bf16 runs the MXU at native
    # rate); accumulation is f32 via preferred_element_type.
    h = jnp.dot(x, w1, preferred_element_type=jnp.float32) + b1
    h = jnp.maximum(h, 0.0)
    y = jnp.dot(h.astype(x.dtype), w2, preferred_element_type=jnp.float32) + b2
    # TODO(synk): dropout is identity here (eval-mode semantics); training-mode
    # dropout would use pltpu.prng_seed / pltpu.prng_random_bits.
    y = y + x.astype(jnp.float32)                       # residual add
    mean = mean_fn(y)
    c = y - mean
    var = mean_fn(c * c)
    yn = c * jax.lax.rsqrt(var + LN_EPS)
    return (yn * gamma + beta).astype(out_dtype)


def _ffn_ln_packed_kernel(hidden, width, x_ref, w1_ref, w2_ref, seg_ref, p_ref,
                          o_ref):
    """Lane-dense layout: g rows per 128-lane packed row, block-diag weights."""
    p = p_ref[...]
    seg = seg_ref[...]          # block-diagonal ones/D: segmented mean matrix

    def seg_mean(v):            # per-D-lane-segment mean, broadcast in place
        return jnp.dot(v, seg, preferred_element_type=jnp.float32,
                       precision=jax.lax.Precision.HIGHEST)

    o_ref[...] = _ffn_ln_body(
        x_ref[...], w1_ref[...], w2_ref[...],
        p[0:1, :hidden], p[1:2, :width], p[2:3, :width], p[3:4, :width],
        seg_mean, o_ref.dtype)


def _ffn_ln_plain_kernel(hidden, width, x_ref, w1_ref, w2_ref, p_ref, o_ref):
    """(N, D)-layout fallback (D >= 128, D not dividing 128, or ragged N)."""
    p = p_ref[...]

    def lane_mean(v):
        return jnp.mean(v, axis=-1, keepdims=True)

    o_ref[...] = _ffn_ln_body(
        x_ref[...], w1_ref[...], w2_ref[...],
        p[0:1, :hidden], p[1:2, :width], p[2:3, :width], p[3:4, :width],
        lane_mean, o_ref.dtype)


def positionwise_ffn_conv(x, w1, b1, w2, b2, gamma, beta):
    """x: (B, L, D). w1: (D, H), b1: (H,), w2: (H, D), b2/gamma/beta: (D,)."""
    B, L, D = x.shape
    H = w1.shape[1]
    N = B * L
    x_dt = x.dtype
    x_item = jnp.dtype(x_dt).itemsize
    budget, vmem_limit = _vmem_budget()

    # Lane-dense packing factor: fold g rows onto the 128 lanes when D < 128.
    g = 128 // D if (D <= 128 and 128 % D == 0) else 1
    if g > 1 and N % g != 0:
        # TODO(synk): a bulk/tail split would keep the lane-dense path for
        # ragged N; for now ragged N uses the (N, D)-layout kernel (still no
        # wrapper-side pad / slice, so no extra HBM traffic).
        g = 1

    if g > 1:
        width, hidden, rows = g * D, g * H, N // g
        x2 = x.reshape(rows, width)                 # contiguous -> free reshape
        eye = jnp.eye(g, dtype=jnp.float32)
        w1k = jnp.kron(eye, w1.astype(jnp.float32)).astype(x_dt)
        w2k = jnp.kron(eye, w2.astype(jnp.float32)).astype(x_dt)
        seg = jnp.kron(eye, jnp.full((D, D), 1.0 / D, dtype=jnp.float32))
        b1v = jnp.tile(b1.astype(jnp.float32), g)
        b2v = jnp.tile(b2.astype(jnp.float32), g)
        gv = jnp.tile(gamma.astype(jnp.float32), g)
        bev = jnp.tile(beta.astype(jnp.float32), g)
    else:
        width, hidden, rows = D, H, N
        x2 = x.reshape(rows, width)
        w1k = w1.astype(x_dt)
        w2k = w2.astype(x_dt)
        seg = None
        b1v = b1.astype(jnp.float32)
        b2v = b2.astype(jnp.float32)
        gv = gamma.astype(jnp.float32)
        bev = beta.astype(jnp.float32)

    # Biases + LayerNorm params packed into one small resident f32 operand.
    wp = max(hidden, width)
    params = jnp.zeros((4, wp), jnp.float32)
    params = params.at[0, :hidden].set(b1v)
    params = params.at[1, :width].set(b2v)
    params = params.at[2, :width].set(gv)
    params = params.at[3, :width].set(bev)

    tm, steps = _choose_rows(rows, width, hidden, x_item, budget)

    flops = 4 * rows * width * hidden + 10 * rows * width
    if g > 1:
        flops += 4 * rows * width * width           # segmented mean/var matmuls
    cost = pl.CostEstimate(
        flops=flops,
        transcendentals=N,                          # one rsqrt per original row
        bytes_accessed=(2 * rows * width * x_item
                        + 2 * width * hidden * x_item
                        + (width * width + 4 * wp) * 4))

    def run(single_buffer_consts):
        def const_spec(shape):
            if single_buffer_consts:
                # Constant-index operand: one resident copy is enough; the
                # second pipeline buffer would be pure VMEM waste.
                return pl.BlockSpec(shape, lambda i: (0, 0),
                                    pipeline_mode=pl.Buffered(1))
            return pl.BlockSpec(shape, lambda i: (0, 0))

        in_specs = [pl.BlockSpec((tm, width), lambda i: (i, 0)),   # x rows
                    const_spec((width, hidden)),                   # W1 (blockdiag)
                    const_spec((hidden, width))]                   # W2 (blockdiag)
        operands = [x2, w1k, w2k]
        if g > 1:
            in_specs.append(const_spec((width, width)))            # ones/D block
            operands.append(seg)
            kern = functools.partial(_ffn_ln_packed_kernel, hidden, width)
        else:
            kern = functools.partial(_ffn_ln_plain_kernel, hidden, width)
        in_specs.append(const_spec((4, wp)))                       # b1,b2,gamma,beta
        operands.append(params)

        return pl.pallas_call(
            kern,
            out_shape=jax.ShapeDtypeStruct((rows, width), x_dt),
            grid_spec=pltpu.PrefetchScalarGridSpec(
                num_scalar_prefetch=0,
                grid=(steps,),
                in_specs=in_specs,
                out_specs=pl.BlockSpec((tm, width), lambda i: (i, 0)),
            ),
            compiler_params=pltpu.CompilerParams(
                dimension_semantics=("parallel",),   # shard across v7x's 2 TCs
                vmem_limit_bytes=vmem_limit,
            ),
            cost_estimate=cost,
        )(*operands)

    try:
        out2 = run(single_buffer_consts=True)
    except Exception:
        # pl.Buffered(1) unavailable on this jax/libtpu version: fall back to
        # default double-buffering for the (small-footprint) constant operands.
        out2 = run(single_buffer_consts=False)

    return out2.reshape(B, L, D)


def reference(x, w1, b1, w2, b2, gamma, beta):
    xf = x.astype(jnp.float32)
    h = jnp.maximum(xf @ w1.astype(jnp.float32) + b1, 0.0)
    y = h @ w2.astype(jnp.float32) + b2
    y = y + xf
    mean = jnp.mean(y, axis=-1, keepdims=True)
    var = jnp.mean((y - mean) ** 2, axis=-1, keepdims=True)
    yn = (y - mean) / jnp.sqrt(var + LN_EPS)
    return (yn * gamma + beta).astype(x.dtype)


if __name__ == "__main__":
    dim_model, dim_hidden = 16, 32

    key = jax.random.PRNGKey(0)
    kx, k1, k2, k3, k4, k5, k6, kx2, kx3 = jax.random.split(key, 9)

    # conv_1: Conv1d(D -> H, k=1) -> (D, H) matmul weight
    w1 = jax.random.normal(k1, (dim_model, dim_hidden), dtype=jnp.float32) * 0.1
    b1 = jax.random.normal(k2, (dim_hidden,), dtype=jnp.float32) * 0.1
    # conv_2: Conv1d(H -> D, k=1) -> (H, D) matmul weight
    w2 = jax.random.normal(k3, (dim_hidden, dim_model), dtype=jnp.float32) * 0.1
    b2 = jax.random.normal(k4, (dim_model,), dtype=jnp.float32) * 0.1
    # LayerNorm affine params
    gamma = 1.0 + 0.1 * jax.random.normal(k5, (dim_model,), dtype=jnp.float32)
    beta = 0.1 * jax.random.normal(k6, (dim_model,), dtype=jnp.float32)

    # Case 1: lane-dense packed path (N = B*L divisible by g = 128 // D = 8).
    B, L = 2, 8
    x = jax.random.normal(kx, (B, L, dim_model), dtype=jnp.float32)
    out = jax.block_until_ready(
        positionwise_ffn_conv(x, w1, b1, w2, b2, gamma, beta))
    ref = reference(x, w1, b1, w2, b2, gamma, beta)
    assert out.shape == (B, L, dim_model)
    # Tolerance covers possible MXU default (bf16-pass) precision in the
    # segmented-mean matmuls; with full-precision lowering the error is ~1e-5.
    assert jnp.allclose(out, ref, atol=3e-2, rtol=3e-2)

    # Case 2: ragged N = 10 -> (N, D)-layout fallback (no pad, no output slice).
    B2, L2 = 2, 5
    x_b = jax.random.normal(kx2, (B2, L2, dim_model), dtype=jnp.float32)
    out_b = jax.block_until_ready(
        positionwise_ffn_conv(x_b, w1, b1, w2, b2, gamma, beta))
    ref_b = reference(x_b, w1, b1, w2, b2, gamma, beta)
    assert out_b.shape == (B2, L2, dim_model)
    assert jnp.allclose(out_b, ref_b, atol=1e-4, rtol=1e-4)

    # Case 3: bf16 activations through the packed path (native MXU dtype).
    x_h = jax.random.normal(kx3, (B, L, dim_model),
                            dtype=jnp.float32).astype(jnp.bfloat16)
    out_h = jax.block_until_ready(
        positionwise_ffn_conv(x_h, w1, b1, w2, b2, gamma, beta))
    ref_h = reference(x_h, w1, b1, w2, b2, gamma, beta)
    assert out_h.shape == (B, L, dim_model)
    assert jnp.allclose(out_h.astype(jnp.float32), ref_h.astype(jnp.float32),
                        atol=1e-1, rtol=1e-1)

    print("KERNEL_OK")
</pallas_src>

<mosaic_0001>
module attributes {stable_mosaic.version = 11 : i64} {
  func.func @_ffn_ln_packed_kernel(%arg0: i32, %arg1: memref<2x128xf32, #tpu.memory_space<vmem>>, %arg2: memref<128x256xf32, #tpu.memory_space<vmem>>, %arg3: memref<256x128xf32, #tpu.memory_space<vmem>>, %arg4: memref<128x128xf32, #tpu.memory_space<vmem>>, %arg5: memref<4x256xf32, #tpu.memory_space<vmem>>, %arg6: memref<2x128xf32, #tpu.memory_space<vmem>>) attributes {dimension_semantics = [#tpu.dimension_semantics<parallel>], iteration_bounds = array<i64: 1>, scalar_prefetch = 0 : i64, scratch_operands = 0 : i64, tpu.core_type = #tpu.core_type<tc>, window_params = [{transform_indices = @transform_0, window_bounds = array<i64: 2, 128>}, {pipeline_mode = #tpu.pipeline_mode<synchronous>, transform_indices = @transform_1, window_bounds = array<i64: 128, 256>}, {pipeline_mode = #tpu.pipeline_mode<synchronous>, transform_indices = @transform_2, window_bounds = array<i64: 256, 128>}, {pipeline_mode = #tpu.pipeline_mode<synchronous>, transform_indices = @transform_3, window_bounds = array<i64: 128, 128>}, {pipeline_mode = #tpu.pipeline_mode<synchronous>, transform_indices = @transform_4, window_bounds = array<i64: 4, 256>}, {transform_indices = @transform_5, window_bounds = array<i64: 2, 128>}]} {
    %c0 = arith.constant 0 : index
    %c0_0 = arith.constant 0 : index
    %0 = vector.load %arg5[%c0, %c0_0] : memref<4x256xf32, #tpu.memory_space<vmem>>, vector<4x256xf32>
    %c0_1 = arith.constant 0 : index
    %c0_2 = arith.constant 0 : index
    %1 = vector.load %arg4[%c0_1, %c0_2] : memref<128x128xf32, #tpu.memory_space<vmem>>, vector<128x128xf32>
    %c0_3 = arith.constant 0 : index
    %c0_4 = arith.constant 0 : index
    %2 = vector.load %arg1[%c0_3, %c0_4] : memref<2x128xf32, #tpu.memory_space<vmem>>, vector<2x128xf32>
    %c0_5 = arith.constant 0 : index
    %c0_6 = arith.constant 0 : index
    %3 = vector.load %arg2[%c0_5, %c0_6] : memref<128x256xf32, #tpu.memory_space<vmem>>, vector<128x256xf32>
    %c0_7 = arith.constant 0 : index
    %c0_8 = arith.constant 0 : index
    %4 = vector.load %arg3[%c0_7, %c0_8] : memref<256x128xf32, #tpu.memory_space<vmem>>, vector<256x128xf32>
    %5 = vector.extract_strided_slice %0 {offsets = [0, 0], sizes = [1, 256], strides = [1, 1]} : vector<4x256xf32> to vector<1x256xf32>
    %6 = vector.extract_strided_slice %0 {offsets = [1, 0], sizes = [1, 128], strides = [1, 1]} : vector<4x256xf32> to vector<1x128xf32>
    %7 = vector.extract_strided_slice %0 {offsets = [2, 0], sizes = [1, 128], strides = [1, 1]} : vector<4x256xf32> to vector<1x128xf32>
    %8 = vector.extract_strided_slice %0 {offsets = [3, 0], sizes = [1, 128], strides = [1, 1]} : vector<4x256xf32> to vector<1x128xf32>
    %cst = arith.constant dense<0.000000e+00> : vector<2x256xf32>
    %9 = tpu.matmul %2, %3, %cst {dimension_numbers = #tpu.dot_dimension_numbers<[1], [0], [0], [1], [0, 0, 1, 1], [], []>} : vector<2x128xf32>, vector<128x256xf32>, vector<2x256xf32> -> vector<2x256xf32>
    %10 = vector.broadcast %5 : vector<1x256xf32> to vector<2x256xf32>
    %11 = arith.addf %9, %10 : vector<2x256xf32>
    %cst_9 = arith.constant 0.000000e+00 : f32
    %12 = vector.broadcast %cst_9 : f32 to vector<2x256xf32>
    %13 = arith.maximumf %11, %12 : vector<2x256xf32>
    %cst_10 = arith.constant dense<0.000000e+00> : vector<2x128xf32>
    %14 = tpu.matmul %13, %4, %cst_10 {dimension_numbers = #tpu.dot_dimension_numbers<[1], [0], [0], [1], [0, 0, 1, 1], [], []>} : vector<2x256xf32>, vector<256x128xf32>, vector<2x128xf32> -> vector<2x128xf32>
    %15 = vector.broadcast %6 : vector<1x128xf32> to vector<2x128xf32>
    %16 = arith.addf %14, %15 : vector<2x128xf32>
    %17 = arith.addf %16, %2 : vector<2x128xf32>
    %cst_11 = arith.constant dense<0.000000e+00> : vector<2x128xf32>
    %18 = tpu.matmul %17, %1, %cst_11 {dimension_numbers = #tpu.dot_dimension_numbers<[1], [0], [0], [1], [0, 0, 1, 1], [], []>, precision = #tpu.contract_precision<fp32>} : vector<2x128xf32>, vector<128x128xf32>, vector<2x128xf32> -> vector<2x128xf32>
    %19 = arith.subf %17, %18 : vector<2x128xf32>
    %20 = arith.mulf %19, %19 : vector<2x128xf32>
    %cst_12 = arith.constant dense<0.000000e+00> : vector<2x128xf32>
    %21 = tpu.matmul %20, %1, %cst_12 {dimension_numbers = #tpu.dot_dimension_numbers<[1], [0], [0], [1], [0, 0, 1, 1], [], []>, precision = #tpu.contract_precision<fp32>} : vector<2x128xf32>, vector<128x128xf32>, vector<2x128xf32> -> vector<2x128xf32>
    %cst_13 = arith.constant 9.99999974E-6 : f32
    %22 = vector.broadcast %cst_13 : f32 to vector<2x128xf32>
    %23 = arith.addf %21, %22 : vector<2x128xf32>
    %24 = math.rsqrt %23 : vector<2x128xf32>
    %25 = arith.mulf %19, %24 : vector<2x128xf32>
    %26 = vector.broadcast %7 : vector<1x128xf32> to vector<2x128xf32>
    %27 = arith.mulf %25, %26 : vector<2x128xf32>
    %28 = vector.broadcast %8 : vector<1x128xf32> to vector<2x128xf32>
    %29 = arith.addf %27, %28 : vector<2x128xf32>
    %c0_14 = arith.constant 0 : index
    %c0_15 = arith.constant 0 : index
    %30 = vector.load %arg6[%c0_14, %c0_15] : memref<2x128xf32, #tpu.memory_space<vmem>>, vector<2x128xf32>
    tpu.vector_store %arg6[%c0_14, %c0_15], %29 {strides = array<i32>} : memref<2x128xf32, #tpu.memory_space<vmem>>, vector<2x128xf32>,
    return
  }
  func.func @transform_0(%arg0: i32) -> (i32, i32) {
    %c0_i32 = arith.constant 0 : i32
    %c0_i32_0 = arith.constant 0 : i32
    return %arg0, %c0_i32 : i32, i32
  }
  func.func @transform_1(%arg0: i32) -> (i32, i32) {
    %c0_i32 = arith.constant 0 : i32
    %c0_i32_0 = arith.constant 0 : i32
    %c0_i32_1 = arith.constant 0 : i32
    return %c0_i32, %c0_i32_0 : i32, i32
  }
  func.func @transform_2(%arg0: i32) -> (i32, i32) {
    %c0_i32 = arith.constant 0 : i32
    %c0_i32_0 = arith.constant 0 : i32
    %c0_i32_1 = arith.constant 0 : i32
    return %c0_i32, %c0_i32_0 : i32, i32
  }
  func.func @transform_3(%arg0: i32) -> (i32, i32) {
    %c0_i32 = arith.constant 0 : i32
    %c0_i32_0 = arith.constant 0 : i32
    %c0_i32_1 = arith.constant 0 : i32
    return %c0_i32, %c0_i32_0 : i32, i32
  }
  func.func @transform_4(%arg0: i32) -> (i32, i32) {
    %c0_i32 = arith.constant 0 : i32
    %c0_i32_0 = arith.constant 0 : i32
    %c0_i32_1 = arith.constant 0 : i32
    return %c0_i32, %c0_i32_0 : i32, i32
  }
  func.func @transform_5(%arg0: i32) -> (i32, i32) {
    %c0_i32 = arith.constant 0 : i32
    %c0_i32_0 = arith.constant 0 : i32
    return %arg0, %c0_i32 : i32, i32
  }
}

module attributes {stable_mosaic.version = 11 : i64} {
  func.func @_ffn_ln_packed_kernel(%arg0: i32, %arg1: memref<2x128xf32, #tpu.memory_space<vmem>>, %arg2: memref<128x256xf32, #tpu.memory_space<vmem>>, %arg3: memref<256x128xf32, #tpu.memory_space<vmem>>, %arg4: memref<128x128xf32, #tpu.memory_space<vmem>>, %arg5: memref<4x256xf32, #tpu.memory_space<vmem>>, %arg6: memref<2x128xf32, #tpu.memory_space<vmem>>) attributes {dimension_semantics = [#tpu.dimension_semantics<parallel>], iteration_bounds = array<i64: 1>, scalar_prefetch = 0 : i64, scratch_operands = 0 : i64, tpu.core_type = #tpu.core_type<tc>, window_params = [{transform_indices = @transform_0, window_bounds = array<i64: 2, 128>}, {pipeline_mode = #tpu.pipeline_mode<synchronous>, transform_indices = @transform_1, window_bounds = array<i64: 128, 256>}, {pipeline_mode = #tpu.pipeline_mode<synchronous>, transform_indices = @transform_2, window_bounds = array<i64: 256, 128>}, {pipeline_mode = #tpu.pipeline_mode<synchronous>, transform_indices = @transform_3, window_bounds = array<i64: 128, 128>}, {pipeline_mode = #tpu.pipeline_mode<synchronous>, transform_indices = @transform_4, window_bounds = array<i64: 4, 256>}, {transform_indices = @transform_5, window_bounds = array<i64: 2, 128>}]} {
    %c0 = arith.constant 0 : index
    %c0_0 = arith.constant 0 : index
    %0 = vector.load %arg5[%c0, %c0_0] : memref<4x256xf32, #tpu.memory_space<vmem>>, vector<4x256xf32>
    %c0_1 = arith.constant 0 : index
    %c0_2 = arith.constant 0 : index
    %1 = vector.load %arg4[%c0_1, %c0_2] : memref<128x128xf32, #tpu.memory_space<vmem>>, vector<128x128xf32>
    %c0_3 = arith.constant 0 : index
    %c0_4 = arith.constant 0 : index
    %2 = vector.load %arg1[%c0_3, %c0_4] : memref<2x128xf32, #tpu.memory_space<vmem>>, vector<2x128xf32>
    %c0_5 = arith.constant 0 : index
    %c0_6 = arith.constant 0 : index
    %3 = vector.load %arg2[%c0_5, %c0_6] : memref<128x256xf32, #tpu.memory_space<vmem>>, vector<128x256xf32>
    %c0_7 = arith.constant 0 : index
    %c0_8 = arith.constant 0 : index
    %4 = vector.load %arg3[%c0_7, %c0_8] : memref<256x128xf32, #tpu.memory_space<vmem>>, vector<256x128xf32>
    %5 = vector.extract_strided_slice %0 {offsets = [0, 0], sizes = [1, 256], strides = [1, 1]} : vector<4x256xf32> to vector<1x256xf32>
    %6 = vector.extract_strided_slice %0 {offsets = [1, 0], sizes = [1, 128], strides = [1, 1]} : vector<4x256xf32> to vector<1x128xf32>
    %7 = vector.extract_strided_slice %0 {offsets = [2, 0], sizes = [1, 128], strides = [1, 1]} : vector<4x256xf32> to vector<1x128xf32>
    %8 = vector.extract_strided_slice %0 {offsets = [3, 0], sizes = [1, 128], strides = [1, 1]} : vector<4x256xf32> to vector<1x128xf32>
    %cst = arith.constant dense<0.000000e+00> : vector<2x256xf32>
    %9 = tpu.matmul %2, %3, %cst {dimension_numbers = #tpu.dot_dimension_numbers<[1], [0], [0], [1], [0, 0, 1, 1], [], []>} : vector<2x128xf32>, vector<128x256xf32>, vector<2x256xf32> -> vector<2x256xf32>
    %10 = vector.broadcast %5 : vector<1x256xf32> to vector<2x256xf32>
    %11 = arith.addf %9, %10 : vector<2x256xf32>
    %cst_9 = arith.constant 0.000000e+00 : f32
    %12 = vector.broadcast %cst_9 : f32 to vector<2x256xf32>
    %13 = arith.maximumf %11, %12 : vector<2x256xf32>
    %cst_10 = arith.constant dense<0.000000e+00> : vector<2x128xf32>
    %14 = tpu.matmul %13, %4, %cst_10 {dimension_numbers = #tpu.dot_dimension_numbers<[1], [0], [0], [1], [0, 0, 1, 1], [], []>} : vector<2x256xf32>, vector<256x128xf32>, vector<2x128xf32> -> vector<2x128xf32>
    %15 = vector.broadcast %6 : vector<1x128xf32> to vector<2x128xf32>
    %16 = arith.addf %14, %15 : vector<2x128xf32>
    %17 = arith.addf %16, %2 : vector<2x128xf32>
    %cst_11 = arith.constant dense<0.000000e+00> : vector<2x128xf32>
    %18 = tpu.matmul %17, %1, %cst_11 {dimension_numbers = #tpu.dot_dimension_numbers<[1], [0], [0], [1], [0, 0, 1, 1], [], []>, precision = #tpu.contract_precision<fp32>} : vector<2x128xf32>, vector<128x128xf32>, vector<2x128xf32> -> vector<2x128xf32>
    %19 = arith.subf %17, %18 : vector<2x128xf32>
    %20 = arith.mulf %19, %19 : vector<2x128xf32>
    %cst_12 = arith.constant dense<0.000000e+00> : vector<2x128xf32>
    %21 = tpu.matmul %20, %1, %cst_12 {dimension_numbers = #tpu.dot_dimension_numbers<[1], [0], [0], [1], [0, 0, 1, 1], [], []>, precision = #tpu.contract_precision<fp32>} : vector<2x128xf32>, vector<128x128xf32>, vector<2x128xf32> -> vector<2x128xf32>
    %cst_13 = arith.constant 9.99999974E-6 : f32
    %22 = vector.broadcast %cst_13 : f32 to vector<2x128xf32>
    %23 = arith.addf %21, %22 : vector<2x128xf32>
    %24 = math.rsqrt %23 : vector<2x128xf32>
    %25 = arith.mulf %19, %24 : vector<2x128xf32>
    %26 = vector.broadcast %7 : vector<1x128xf32> to vector<2x128xf32>
    %27 = arith.mulf %25, %26 : vector<2x128xf32>
    %28 = vector.broadcast %8 : vector<1x128xf32> to vector<2x128xf32>
    %29 = arith.addf %27, %28 : vector<2x128xf32>
    %c0_14 = arith.constant 0 : index
    %c0_15 = arith.constant 0 : index
    %30 = vector.load %arg6[%c0_14, %c0_15] : memref<2x128xf32, #tpu.memory_space<vmem>>, vector<2x128xf32>
    tpu.vector_store %arg6[%c0_14, %c0_15], %29 {strides = array<i32>} : memref<2x128xf32, #tpu.memory_space<vmem>>, vector<2x128xf32>,
    return
  }
  func.func @transform_0(%arg0: i32) -> (i32, i32) {
    %c0_i32 = arith.constant 0 : i32
    %c0_i32_0 = arith.constant 0 : i32
    return %arg0, %c0_i32 : i32, i32
  }
  func.func @transform_1(%arg0: i32) -> (i32, i32) {
    %c0_i32 = arith.constant 0 : i32
    %c0_i32_0 = arith.constant 0 : i32
    %c0_i32_1 = arith.constant 0 : i32
    return %c0_i32, %c0_i32_0 : i32, i32
  }
  func.func @transform_2(%arg0: i32) -> (i32, i32) {
    %c0_i32 = arith.constant 0 : i32
    %c0_i32_0 = arith.constant 0 : i32
    %c0_i32_1 = arith.constant 0 : i32
    return %c0_i32, %c0_i32_0 : i32, i32
  }
  func.func @transform_3(%arg0: i32) -> (i32, i32) {
    %c0_i32 = arith.constant 0 : i32
    %c0_i32_0 = arith.constant 0 : i32
    %c0_i32_1 = arith.constant 0 : i32
    return %c0_i32, %c0_i32_0 : i32, i32
  }
  func.func @transform_4(%arg0: i32) -> (i32, i32) {
    %c0_i32 = arith.constant 0 : i32
    %c0_i32_0 = arith.constant 0 : i32
    %c0_i32_1 = arith.constant 0 : i32
    return %c0_i32, %c0_i32_0 : i32, i32
  }
  func.func @transform_5(%arg0: i32) -> (i32, i32) {
    %c0_i32 = arith.constant 0 : i32
    %c0_i32_0 = arith.constant 0 : i32
    return %arg0, %c0_i32 : i32, i32
  }
}

</mosaic_0001>

<llo_original>
// kernel: tpu_custom_call.1
$region0: #{tpu_custom_call.1}
  #allocation0 [shape = 'u32[]', space=smem, size = 0x4, offset = 0x4, fixed_abs, tag = 'smem constant byte address 0x4 - core index']
  #allocation1 [shape = 'u32[72,128]{1,0:T(1,128)}', space=vmem, size = 0x9000, scoped, tag = 'internal scratch']
  %s0 = inlined_call_operand.hbm [shape: f32[2,128], index: 0, kind: input, shape index: {}]
  %s1 = inlined_call_operand.hbm [shape: f32[128,256], index: 1, kind: input, shape index: {}]
  %s2 = inlined_call_operand.hbm [shape: f32[256,128], index: 2, kind: input, shape index: {}]
  %s3 = inlined_call_operand.hbm [shape: f32[128,128], index: 3, kind: input, shape index: {}]
  %s4 = inlined_call_operand.hbm [shape: f32[4,256], index: 4, kind: input, shape index: {}]
  %s5 = inlined_call_operand.hbm [shape: f32[2,128], index: 5, kind: output, shape index: {}]
  %s6 = sld [smem:[#allocation0]]
  $region50: #{tpu_custom_call.1} parent=0
    _
  %s8 = ssub.s32 1, %s6
  %s9 = scalar_select 0, %s8, %s6
  $region1: #{tpu_custom_call.1} parent=0
    #allocation2 [shape = 'u8[1024]{0}', space=vmem, size = 0x400, scoped, tag = 'input window, operand 0, single buffered']
    #allocation3 [shape = 's32[1]{0}', space=sflag, size = 0x4, scoped, tag = 'scoped memory for tpu_custom_call.1']
    #allocation4 [shape = 's32[1]{0}', space=sflag, size = 0x4, scoped, tag = 'scoped memory for tpu_custom_call.1']
    #allocation5 [shape = 'u8[131072]{0}', space=vmem, size = 0x20000, scoped, tag = 'input window, operand 1, single buffered']
    #allocation6 [shape = 's32[1]{0}', space=sflag, size = 0x4, scoped, tag = 'scoped memory for tpu_custom_call.1']
    #allocation7 [shape = 'u8[131072]{0}', space=vmem, size = 0x20000, scoped, tag = 'input window, operand 2, single buffered']
    #allocation8 [shape = 'u8[65536]{0}', space=vmem, size = 0x10000, scoped, tag = 'input window, operand 3, single buffered']
    #allocation9 [shape = 's32[1]{0}', space=sflag, size = 0x4, scoped, tag = 'scoped memory for tpu_custom_call.1']
    #allocation10 [shape = 'u8[4096]{0}', space=vmem, size = 0x1000, scoped, tag = 'input window, operand 4, single buffered']
    #allocation11 [shape = 'u8[1024]{0}', space=vmem, size = 0x400, scoped, tag = 'output window, operand 0, single buffered']
    %10 = vsyncpa [#allocation3], 0
    %11 = vsyncpa [#allocation6], 0
    %12 = vsyncpa [#allocation9], 0
    %13 = vsyncpa [#allocation4], 0
    // Predicated region
    $region2: #{tpu_custom_call.1} parent=1 // pred_check
      _
    $region3: #{tpu_custom_call.1} parent=1 // pred_check_branch
      %15 = sbr.rel (0) target = $region5
    $region4: #{tpu_custom_call.1} parent=1 // pred_region
      %17 = vsyncadd [#allocation3], 0
      %s19 = sshll.u32 %s0, 4
      %s20 = int_to_ptr.hbm [resolvable:$true] %s19
      %s21 = sshll.u32 [#allocation2], 4
      %s22 = int_to_ptr.vmem [resolvable:$true] %s21
      %24 = dma.hbm_to_vmem [thread:$0]  %s20, 32, %s22, [#allocation3]
    $region5: #{tpu_custom_call.1} parent=1 // pred_fallthru
      _
    // Predicated region
    $region6: #{tpu_custom_call.1} parent=1 // pred_check
      _
    $region7: #{tpu_custom_call.1} parent=1 // pred_check_branch
      %26 = sbr.rel (0) target = $region9
    $region8: #{tpu_custom_call.1} parent=1 // pred_region
      %28 = vsyncadd [#allocation6], 0
      %s29 = sshll.u32 %s1, 4
      %s30 = int_to_ptr.hbm [resolvable:$true] %s29
      %s31 = sshll.u32 [#allocation5], 4
      %s32 = int_to_ptr.vmem [resolvable:$true] %s31
      %37 = dma.hbm_to_vmem [thread:$0]  %s30, 4096, %s32, [#allocation6], 256, 256, 16
    $region9: #{tpu_custom_call.1} parent=1 // pred_fallthru
      _
    // Predicated region
    $region10: #{tpu_custom_call.1} parent=1 // pred_check
      _
    $region11: #{tpu_custom_call.1} parent=1 // pred_check_branch
      %39 = sbr.rel (0) target = $region13
    $region12: #{tpu_custom_call.1} parent=1 // pred_region
      %41 = vsyncadd [#allocation6], 0
      %s42 = sshll.u32 %s2, 4
      %s43 = int_to_ptr.hbm [resolvable:$true] %s42
      %s44 = sshll.u32 [#allocation7], 4
      %s45 = int_to_ptr.vmem [resolvable:$true] %s44
      %50 = dma.hbm_to_vmem [thread:$0]  %s43, 4096, %s45, [#allocation6], 128, 128, 8
    $region13: #{tpu_custom_call.1} parent=1 // pred_fallthru
      _
    // Predicated region
    $region14: #{tpu_custom_call.1} parent=1 // pred_check
      _
    $region15: #{tpu_custom_call.1} parent=1 // pred_check_branch
      %52 = sbr.rel (0) target = $region17
    $region16: #{tpu_custom_call.1} parent=1 // pred_region
      %54 = vsyncadd [#allocation9], 0
      %s55 = sshll.u32 %s3, 4
      %s56 = int_to_ptr.hbm [resolvable:$true] %s55
      %s57 = sshll.u32 [#allocation8], 4
      %s58 = int_to_ptr.vmem [resolvable:$true] %s57
      %63 = dma.hbm_to_vmem [thread:$0]  %s56, 2048, %s58, [#allocation9], 128, 128, 8
    $region17: #{tpu_custom_call.1} parent=1 // pred_fallthru
      _
    // Predicated region
    $region18: #{tpu_custom_call.1} parent=1 // pred_check
      _
    $region19: #{tpu_custom_call.1} parent=1 // pred_check_branch
      %65 = sbr.rel (0) target = $region21
    $region20: #{tpu_custom_call.1} parent=1 // pred_region
      %67 = vsyncadd [#allocation9], 0
      %s69 = sshll.u32 %s4, 4
      %s70 = int_to_ptr.hbm [resolvable:$true] %s69
      %s71 = sshll.u32 [#allocation10], 4
      %s72 = int_to_ptr.vmem [resolvable:$true] %s71
      %74 = dma.hbm_to_vmem [thread:$0]  %s70, 128, %s72, [#allocation9]
    $region21: #{tpu_custom_call.1} parent=1 // pred_fallthru
      _
    // Predicated region
    $region22: #{tpu_custom_call.1} parent=1 // pred_check
      _
    $region23: #{tpu_custom_call.1} parent=1 // pred_check_branch
      %76 = sbr.rel (0) target = $region25
    $region24: #{tpu_custom_call.1} parent=1 // pred_region
      %78 = dma.done [#allocation3], 32
    $region25: #{tpu_custom_call.1} parent=1 // pred_fallthru
      _
    // Predicated region
    $region26: #{tpu_custom_call.1} parent=1 // pred_check
      _
    $region27: #{tpu_custom_call.1} parent=1 // pred_check_branch
      %80 = sbr.rel (0) target = $region29
    $region28: #{tpu_custom_call.1} parent=1 // pred_region
      %82 = dma.done [#allocation6], 4096
    $region29: #{tpu_custom_call.1} parent=1 // pred_fallthru
      _
    // Predicated region
    $region30: #{tpu_custom_call.1} parent=1 // pred_check
      _
    $region31: #{tpu_custom_call.1} parent=1 // pred_check_branch
      %84 = sbr.rel (0) target = $region33
    $region32: #{tpu_custom_call.1} parent=1 // pred_region
      %86 = dma.done [#allocation6], 4096
    $region33: #{tpu_custom_call.1} parent=1 // pred_fallthru
      _
    // Predicated region
    $region34: #{tpu_custom_call.1} parent=1 // pred_check
      _
    $region35: #{tpu_custom_call.1} parent=1 // pred_check_branch
      %88 = sbr.rel (0) target = $region37
    $region36: #{tpu_custom_call.1} parent=1 // pred_region
      %90 = dma.done [#allocation9], 2048
    $region37: #{tpu_custom_call.1} parent=1 // pred_fallthru
      _
    // Predicated region
    $region38: #{tpu_custom_call.1} parent=1 // pred_check
      _
    $region39: #{tpu_custom_call.1} parent=1 // pred_check_branch
      %92 = sbr.rel (0) target = $region41
    $region40: #{tpu_custom_call.1} parent=1 // pred_region
      %94 = dma.done [#allocation9], 128
    $region41: #{tpu_custom_call.1} parent=1 // pred_fallthru
      _
    %v95 = vld [vmem:[#allocation10] sm:$0xff]
    %v96 = vld [vmem:[#allocation8] sm:$0xff]
    %v97 = vld [vmem:[#allocation8 + $0x8] sm:$0xff]
    %v98 = vld [vmem:[#allocation8 + $0x10] sm:$0xff]
    %v99 = vld [vmem:[#allocation8 + $0x18] sm:$0xff]
    %v100 = vld [vmem:[#allocation8 + $0x20] sm:$0xff]
    %v101 = vld [vmem:[#allocation8 + $0x28] sm:$0xff]
    %v102 = vld [vmem:[#allocation8 + $0x30] sm:$0xff]
    %v103 = vld [vmem:[#allocation8 + $0x38] sm:$0xff]
    %v104 = vld [vmem:[#allocation8 + $0x40] sm:$0xff]
    %v105 = vld [vmem:[#allocation8 + $0x48] sm:$0xff]
    %v106 = vld [vmem:[#allocation8 + $0x50] sm:$0xff]
    %v107 = vld [vmem:[#allocation8 + $0x58] sm:$0xff]
    %v108 = vld [vmem:[#allocation8 + $0x60] sm:$0xff]
    %v109 = vld [vmem:[#allocation8 + $0x68] sm:$0xff]
    %v110 = vld [vmem:[#allocation8 + $0x70] sm:$0xff]
    %v111 = vld [vmem:[#allocation8 + $0x78] sm:$0xff]
    %v112 = vld [vmem:[#allocation2] sm:$0x3]
    %v113 = vld [vmem:[#allocation5] sm:$0xff]
    %v114 = vld [vmem:[#allocation5 + $0x8] sm:$0xff]
    %v115 = vld [vmem:[#allocation5 + $0x10] sm:$0xff]
    %v116 = vld [vmem:[#allocation5 + $0x18] sm:$0xff]
    %v117 = vld [vmem:[#allocation5 + $0x20] sm:$0xff]
    %v118 = vld [vmem:[#allocation5 + $0x28] sm:$0xff]
    %v119 = vld [vmem:[#allocation5 + $0x30] sm:$0xff]
    %v120 = vld [vmem:[#allocation5 + $0x38] sm:$0xff]
    %v121 = vld [vmem:[#allocation5 + $0x40] sm:$0xff]
    %v122 = vld [vmem:[#allocation5 + $0x48] sm:$0xff]
    %v123 = vld [vmem:[#allocation5 + $0x50] sm:$0xff]
    %v124 = vld [vmem:[#allocation5 + $0x58] sm:$0xff]
    %v125 = vld [vmem:[#allocation5 + $0x60] sm:$0xff]
    %v126 = vld [vmem:[#allocation5 + $0x68] sm:$0xff]
    %v127 = vld [vmem:[#allocation5 + $0x70] sm:$0xff]
    %v128 = vld [vmem:[#allocation5 + $0x78] sm:$0xff]
    %v129 = vld [vmem:[#allocation5 + $0x80] sm:$0xff]
    %v130 = vld [vmem:[#allocation5 + $0x88] sm:$0xff]
    %v131 = vld [vmem:[#allocation5 + $0x90] sm:$0xff]
    %v132 = vld [vmem:[#allocation5 + $0x98] sm:$0xff]
    %v133 = vld [vmem:[#allocation5 + $0xa0] sm:$0xff]
    %v134 = vld [vmem:[#allocation5 + $0xa8] sm:$0xff]
    %v135 = vld [vmem:[#allocation5 + $0xb0] sm:$0xff]
    %v136 = vld [vmem:[#allocation5 + $0xb8] sm:$0xff]
    %v137 = vld [vmem:[#allocation5 + $0xc0] sm:$0xff]
    %v138 = vld [vmem:[#allocation5 + $0xc8] sm:$0xff]
    %v139 = vld [vmem:[#allocation5 + $0xd0] sm:$0xff]
    %v140 = vld [vmem:[#allocation5 + $0xd8] sm:$0xff]
    %v141 = vld [vmem:[#allocation5 + $0xe0] sm:$0xff]
    %v142 = vld [vmem:[#allocation5 + $0xe8] sm:$0xff]
    %v143 = vld [vmem:[#allocation5 + $0xf0] sm:$0xff]
    %v144 = vld [vmem:[#allocation5 + $0xf8] sm:$0xff]
    %v145 = vld [vmem:[#allocation7] sm:$0xff]
    %v146 = vld [vmem:[#allocation7 + $0x8] sm:$0xff]
    %v147 = vld [vmem:[#allocation7 + $0x10] sm:$0xff]
    %v148 = vld [vmem:[#allocation7 + $0x18] sm:$0xff]
    %v149 = vld [vmem:[#allocation7 + $0x20] sm:$0xff]
    %v150 = vld [vmem:[#allocation7 + $0x28] sm:$0xff]
    %v151 = vld [vmem:[#allocation7 + $0x30] sm:$0xff]
    %v152 = vld [vmem:[#allocation7 + $0x38] sm:$0xff]
    %v153 = vld [vmem:[#allocation7 + $0x40] sm:$0xff]
    %v154 = vld [vmem:[#allocation7 + $0x48] sm:$0xff]
    %v155 = vld [vmem:[#allocation7 + $0x50] sm:$0xff]
    %v156 = vld [vmem:[#allocation7 + $0x58] sm:$0xff]
    %v157 = vld [vmem:[#allocation7 + $0x60] sm:$0xff]
    %v158 = vld [vmem:[#allocation7 + $0x68] sm:$0xff]
    %v159 = vld [vmem:[#allocation7 + $0x70] sm:$0xff]
    %v160 = vld [vmem:[#allocation7 + $0x78] sm:$0xff]
    %v161 = vld [vmem:[#allocation7 + $0x80] sm:$0xff]
    %v162 = vld [vmem:[#allocation7 + $0x88] sm:$0xff]
    %v163 = vld [vmem:[#allocation7 + $0x90] sm:$0xff]
    %v164 = vld [vmem:[#allocation7 + $0x98] sm:$0xff]
    %v165 = vld [vmem:[#allocation7 + $0xa0] sm:$0xff]
    %v166 = vld [vmem:[#allocation7 + $0xa8] sm:$0xff]
    %v167 = vld [vmem:[#allocation7 + $0xb0] sm:$0xff]
    %v168 = vld [vmem:[#allocation7 + $0xb8] sm:$0xff]
    %v169 = vld [vmem:[#allocation7 + $0xc0] sm:$0xff]
    %v170 = vld [vmem:[#allocation7 + $0xc8] sm:$0xff]
    %v171 = vld [vmem:[#allocation7 + $0xd0] sm:$0xff]
    %v172 = vld [vmem:[#allocation7 + $0xd8] sm:$0xff]
    %v173 = vld [vmem:[#allocation7 + $0xe0] sm:$0xff]
    %v174 = vld [vmem:[#allocation7 + $0xe8] sm:$0xff]
    %v175 = vld [vmem:[#allocation7 + $0xf0] sm:$0xff]
    %v176 = vld [vmem:[#allocation7 + $0xf8] sm:$0xff]
    %v178 = vperm.slane %v95, 0
    %v179 = vperm.slane %v95, 4
    %v182 = vperm.slane %v178, 0
    %v183 = vperm.slane %v179, 0
    %184 = vmatpush.msra.mxu0 %v143
    %185 = vmatpush.msra.mxu0 %v141
    %186 = vmatpush.msra.mxu0 %v139
    %187 = vmatpush.msra.mxu0 %v137
    %188 = vmatpush.msra.mxu0 %v135
    %189 = vmatpush.msra.mxu0 %v133
    %190 = vmatpush.msra.mxu0 %v131
    %191 = vmatpush.msra.mxu0 %v129
    %192 = vmatpush.msra.mxu0 %v127
    %193 = vmatpush.msra.mxu0 %v125
    %194 = vmatpush.msra.mxu0 %v123
    %195 = vmatpush.msra.mxu0 %v121
    %196 = vmatpush.msra.mxu0 %v119
    %197 = vmatpush.msra.mxu0 %v117
    %198 = vmatpush.msra.mxu0 %v115
    %199 = vmatpush.msra.mxu0 %v113
    %200 = vmatmul.f32.gmra.mxu0 %v112
    %v201 = vpop.f32.mrf.mxu0
    %v202 = vadd.f32 %v182, %v201
    %203 = vdwg.mxu0
    %204 = vmatpush.msra.mxu0 %v144
    %205 = vmatpush.msra.mxu0 %v142
    %206 = vmatpush.msra.mxu0 %v140
    %207 = vmatpush.msra.mxu0 %v138
    %208 = vmatpush.msra.mxu0 %v136
    %209 = vmatpush.msra.mxu0 %v134
    %210 = vmatpush.msra.mxu0 %v132
    %211 = vmatpush.msra.mxu0 %v130
    %212 = vmatpush.msra.mxu0 %v128
    %213 = vmatpush.msra.mxu0 %v126
    %214 = vmatpush.msra.mxu0 %v124
    %215 = vmatpush.msra.mxu0 %v122
    %216 = vmatpush.msra.mxu0 %v120
    %217 = vmatpush.msra.mxu0 %v118
    %218 = vmatpush.msra.mxu0 %v116
    %219 = vmatpush.msra.mxu0 %v114
    %220 = vmatmul.f32.gmra.mxu0 %v112
    %v221 = vpop.f32.mrf.mxu0
    %v222 = vadd.f32 %v183, %v221
    %223 = vdwg.mxu0
    %v224 = vmax.f32 %v202, 0.0
    %v225 = vmax.f32 %v222, 0.0
    %v226 = vperm.slane %v95, 1
    %227 = vmatpush.msra.mxu0 %v160
    %228 = vmatpush.msra.mxu0 %v159
    %229 = vmatpush.msra.mxu0 %v158
    %230 = vmatpush.msra.mxu0 %v157
    %231 = vmatpush.msra.mxu0 %v156
    %232 = vmatpush.msra.mxu0 %v155
    %233 = vmatpush.msra.mxu0 %v154
    %234 = vmatpush.msra.mxu0 %v153
    %235 = vmatpush.msra.mxu0 %v152
    %236 = vmatpush.msra.mxu0 %v151
    %237 = vmatpush.msra.mxu0 %v150
    %238 = vmatpush.msra.mxu0 %v149
    %239 = vmatpush.msra.mxu0 %v148
    %240 = vmatpush.msra.mxu0 %v147
    %241 = vmatpush.msra.mxu0 %v146
    %242 = vmatpush.msra.mxu0 %v145
    %243 = vmatmul.f32.gmra.mxu0 %v224
    %v244 = vpop.f32.mrf.mxu0
    %v245 = vadd.f32 %v226, %v244
    %246 = vdwg.mxu0
    %247 = vmatpush.msra.mxu0 %v176
    %248 = vmatpush.msra.mxu0 %v175
    %249 = vmatpush.msra.mxu0 %v174
    %250 = vmatpush.msra.mxu0 %v173
    %251 = vmatpush.msra.mxu0 %v172
    %252 = vmatpush.msra.mxu0 %v171
    %253 = vmatpush.msra.mxu0 %v170
    %254 = vmatpush.msra.mxu0 %v169
    %255 = vmatpush.msra.mxu0 %v168
    %256 = vmatpush.msra.mxu0 %v167
    %257 = vmatpush.msra.mxu0 %v166
    %258 = vmatpush.msra.mxu0 %v165
    %259 = vmatpush.msra.mxu0 %v164
    %260 = vmatpush.msra.mxu0 %v163
    %261 = vmatpush.msra.mxu0 %v162
    %262 = vmatpush.msra.mxu0 %v161
    %263 = vmatmul.f32.gmra.mxu0 %v225
    %v264 = vpop.f32.mrf.mxu0
    %v265 = vadd.f32 %v245, %v264
    %266 = vdwg.mxu0
    %v267 = vadd.f32 %v265, %v112
    %v268 = vand.u32 %v111, 4294901760
    %269 = vmatpush.msra.mxu0 %v268
    %v270 = vand.u32 %v110, 4294901760
    %271 = vmatpush.msra.mxu0 %v270
    %v272 = vand.u32 %v109, 4294901760
    %273 = vmatpush.msra.mxu0 %v272
    %v274 = vand.u32 %v108, 4294901760
    %275 = vmatpush.msra.mxu0 %v274
    %v276 = vand.u32 %v107, 4294901760
    %277 = vmatpush.msra.mxu0 %v276
    %v278 = vand.u32 %v106, 4294901760
    %279 = vmatpush.msra.mxu0 %v278
    %v280 = vand.u32 %v105, 4294901760
    %281 = vmatpush.msra.mxu0 %v280
    %v282 = vand.u32 %v104, 4294901760
    %283 = vmatpush.msra.mxu0 %v282
    %v284 = vand.u32 %v103, 4294901760
    %285 = vmatpush.msra.mxu0 %v284
    %v286 = vand.u32 %v102, 4294901760
    %287 = vmatpush.msra.mxu0 %v286
    %v288 = vand.u32 %v101, 4294901760
    %289 = vmatpush.msra.mxu0 %v288
    %v290 = vand.u32 %v100, 4294901760
    %291 = vmatpush.msra.mxu0 %v290
    %v292 = vand.u32 %v99, 4294901760
    %293 = vmatpush.msra.mxu0 %v292
    %v294 = vand.u32 %v98, 4294901760
    %295 = vmatpush.msra.mxu0 %v294
    %v296 = vand.u32 %v97, 4294901760
    %297 = vmatpush.msra.mxu0 %v296
    %v298 = vand.u32 %v96, 4294901760
    %299 = vmatpush.msra.mxu0 %v298
    %v300 = vand.u32 %v267, 4294901760
    %v301 = vsub.f32 %v267, %v300
    %v302 = vand.u32 %v301, 4294901760
    %v303 = vsub.f32 %v301, %v302
    %v304 = vand.u32 %v303, 4294901760
    %305 = vmatmul.f32.gmra.mxu0 %v304
    %v306 = vpop.f32.mrf.mxu0
    %v307 = vadd.f32 0.0, %v306
    %308 = vdwg.mxu0
    %v309 = vand.u32 %v111, 4294901760
    %v310 = vsub.f32 %v111, %v309
    %v311 = vand.u32 %v310, 4294901760
    %v312 = vsub.f32 %v310, %v311
    %v313 = vand.u32 %v312, 4294901760
    %314 = vmatpush.msra.mxu0 %v313
    %v315 = vand.u32 %v110, 4294901760
    %v316 = vsub.f32 %v110, %v315
    %v317 = vand.u32 %v316, 4294901760
    %v318 = vsub.f32 %v316, %v317
    %v319 = vand.u32 %v318, 4294901760
    %320 = vmatpush.msra.mxu0 %v319
    %v321 = vand.u32 %v109, 4294901760
    %v322 = vsub.f32 %v109, %v321
    %v323 = vand.u32 %v322, 4294901760
    %v324 = vsub.f32 %v322, %v323
    %v325 = vand.u32 %v324, 4294901760
    %326 = vmatpush.msra.mxu0 %v325
    %v327 = vand.u32 %v108, 4294901760
    %v328 = vsub.f32 %v108, %v327
    %v329 = vand.u32 %v328, 4294901760
    %v330 = vsub.f32 %v328, %v329
    %v331 = vand.u32 %v330, 4294901760
    %332 = vmatpush.msra.mxu0 %v331
    %v333 = vand.u32 %v107, 4294901760
    %v334 = vsub.f32 %v107, %v333
    %v335 = vand.u32 %v334, 4294901760
    %v336 = vsub.f32 %v334, %v335
    %v337 = vand.u32 %v336, 4294901760
    %338 = vmatpush.msra.mxu0 %v337
    %v339 = vand.u32 %v106, 4294901760
    %v340 = vsub.f32 %v106, %v339
    %v341 = vand.u32 %v340, 4294901760
    %v342 = vsub.f32 %v340, %v341
    %v343 = vand.u32 %v342, 4294901760
    %344 = vmatpush.msra.mxu0 %v343
    %v345 = vand.u32 %v105, 4294901760
    %v346 = vsub.f32 %v105, %v345
    %v347 = vand.u32 %v346, 4294901760
    %v348 = vsub.f32 %v346, %v347
    %v349 = vand.u32 %v348, 4294901760
    %350 = vmatpush.msra.mxu0 %v349
    %v351 = vand.u32 %v104, 4294901760
    %v352 = vsub.f32 %v104, %v351
    %v353 = vand.u32 %v352, 4294901760
    %v354 = vsub.f32 %v352, %v353
    %v355 = vand.u32 %v354, 4294901760
    %356 = vmatpush.msra.mxu0 %v355
    %v357 = vand.u32 %v103, 4294901760
    %v358 = vsub.f32 %v103, %v357
    %v359 = vand.u32 %v358, 4294901760
    %v360 = vsub.f32 %v358, %v359
    %v361 = vand.u32 %v360, 4294901760
    %362 = vmatpush.msra.mxu0 %v361
    %v363 = vand.u32 %v102, 4294901760
    %v364 = vsub.f32 %v102, %v363
    %v365 = vand.u32 %v364, 4294901760
    %v366 = vsub.f32 %v364, %v365
    %v367 = vand.u32 %v366, 4294901760
    %368 = vmatpush.msra.mxu0 %v367
    %v369 = vand.u32 %v101, 4294901760
    %v370 = vsub.f32 %v101, %v369
    %v371 = vand.u32 %v370, 4294901760
    %v372 = vsub.f32 %v370, %v371
    %v373 = vand.u32 %v372, 4294901760
    %374 = vmatpush.msra.mxu0 %v373
    %v375 = vand.u32 %v100, 4294901760
    %v376 = vsub.f32 %v100, %v375
    %v377 = vand.u32 %v376, 4294901760
    %v378 = vsub.f32 %v376, %v377
    %v379 = vand.u32 %v378, 4294901760
    %380 = vmatpush.msra.mxu0 %v379
    %v381 = vand.u32 %v99, 4294901760
    %v382 = vsub.f32 %v99, %v381
    %v383 = vand.u32 %v382, 4294901760
    %v384 = vsub.f32 %v382, %v383
    %v385 = vand.u32 %v384, 4294901760
    %386 = vmatpush.msra.mxu0 %v385
    %v387 = vand.u32 %v98, 4294901760
    %v388 = vsub.f32 %v98, %v387
    %v389 = vand.u32 %v388, 4294901760
    %v390 = vsub.f32 %v388, %v389
    %v391 = vand.u32 %v390, 4294901760
    %392 = vmatpush.msra.mxu0 %v391
    %v393 = vand.u32 %v97, 4294901760
    %v394 = vsub.f32 %v97, %v393
    %v395 = vand.u32 %v394, 4294901760
    %v396 = vsub.f32 %v394, %v395
    %v397 = vand.u32 %v396, 4294901760
    %398 = vmatpush.msra.mxu0 %v397
    %v399 = vand.u32 %v96, 4294901760
    %v400 = vsub.f32 %v96, %v399
    %v401 = vand.u32 %v400, 4294901760
    %v402 = vsub.f32 %v400, %v401
    %v403 = vand.u32 %v402, 4294901760
    %404 = vmatpush.msra.mxu0 %v403
    %v405 = vand.u32 %v267, 4294901760
    %406 = vmatmul.f32.gmra.mxu0 %v405
    %v407 = vpop.f32.mrf.mxu0
    %v408 = vadd.f32 %v307, %v407
    %409 = vdwg.mxu0
    %v410 = vand.u32 %v111, 4294901760
    %v411 = vsub.f32 %v111, %v410
    %412 = vmatpush.msra.mxu0 %v411
    %v413 = vand.u32 %v110, 4294901760
    %v414 = vsub.f32 %v110, %v413
    %415 = vmatpush.msra.mxu0 %v414
    %v416 = vand.u32 %v109, 4294901760
    %v417 = vsub.f32 %v109, %v416
    %418 = vmatpush.msra.mxu0 %v417
    %v419 = vand.u32 %v108, 4294901760
    %v420 = vsub.f32 %v108, %v419
    %421 = vmatpush.msra.mxu0 %v420
    %v422 = vand.u32 %v107, 4294901760
    %v423 = vsub.f32 %v107, %v422
    %424 = vmatpush.msra.mxu0 %v423
    %v425 = vand.u32 %v106, 4294901760
    %v426 = vsub.f32 %v106, %v425
    %427 = vmatpush.msra.mxu0 %v426
    %v428 = vand.u32 %v105, 4294901760
    %v429 = vsub.f32 %v105, %v428
    %430 = vmatpush.msra.mxu0 %v429
    %v431 = vand.u32 %v104, 4294901760
    %v432 = vsub.f32 %v104, %v431
    %433 = vmatpush.msra.mxu0 %v432
    %v434 = vand.u32 %v103, 4294901760
    %v435 = vsub.f32 %v103, %v434
    %436 = vmatpush.msra.mxu0 %v435
    %v437 = vand.u32 %v102, 4294901760
    %v438 = vsub.f32 %v102, %v437
    %439 = vmatpush.msra.mxu0 %v438
    %v440 = vand.u32 %v101, 4294901760
    %v441 = vsub.f32 %v101, %v440
    %442 = vmatpush.msra.mxu0 %v441
    %v443 = vand.u32 %v100, 4294901760
    %v444 = vsub.f32 %v100, %v443
    %445 = vmatpush.msra.mxu0 %v444
    %v446 = vand.u32 %v99, 4294901760
    %v447 = vsub.f32 %v99, %v446
    %448 = vmatpush.msra.mxu0 %v447
    %v449 = vand.u32 %v98, 4294901760
    %v450 = vsub.f32 %v98, %v449
    %451 = vmatpush.msra.mxu0 %v450
    %v452 = vand.u32 %v97, 4294901760
    %v453 = vsub.f32 %v97, %v452
    %454 = vmatpush.msra.mxu0 %v453
    %v455 = vand.u32 %v96, 4294901760
    %v456 = vsub.f32 %v96, %v455
    %457 = vmatpush.msra.mxu0 %v456
    %v458 = vand.u32 %v267, 4294901760
    %v459 = vsub.f32 %v267, %v458
    %460 = vmatmul.f32.gmra.mxu0 %v459
    %v461 = vpop.f32.mrf.mxu0
    %v462 = vadd.f32 %v408, %v461
    %463 = vdwg.mxu0
    %v464 = vand.u32 %v111, 4294901760
    %465 = vmatpush.msra.mxu0 %v464
    %v466 = vand.u32 %v110, 4294901760
    %467 = vmatpush.msra.mxu0 %v466
    %v468 = vand.u32 %v109, 4294901760
    %469 = vmatpush.msra.mxu0 %v468
    %v470 = vand.u32 %v108, 4294901760
    %471 = vmatpush.msra.mxu0 %v470
    %v472 = vand.u32 %v107, 4294901760
    %473 = vmatpush.msra.mxu0 %v472
    %v474 = vand.u32 %v106, 4294901760
    %475 = vmatpush.msra.mxu0 %v474
    %v476 = vand.u32 %v105, 4294901760
    %477 = vmatpush.msra.mxu0 %v476
    %v478 = vand.u32 %v104, 4294901760
    %479 = vmatpush.msra.mxu0 %v478
    %v480 = vand.u32 %v103, 4294901760
    %481 = vmatpush.msra.mxu0 %v480
    %v482 = vand.u32 %v102, 4294901760
    %483 = vmatpush.msra.mxu0 %v482
    %v484 = vand.u32 %v101, 4294901760
    %485 = vmatpush.msra.mxu0 %v484
    %v486 = vand.u32 %v100, 4294901760
    %487 = vmatpush.msra.mxu0 %v486
    %v488 = vand.u32 %v99, 4294901760
    %489 = vmatpush.msra.mxu0 %v488
    %v490 = vand.u32 %v98, 4294901760
    %491 = vmatpush.msra.mxu0 %v490
    %v492 = vand.u32 %v97, 4294901760
    %493 = vmatpush.msra.mxu0 %v492
    %v494 = vand.u32 %v96, 4294901760
    %495 = vmatpush.msra.mxu0 %v494
    %v496 = vand.u32 %v267, 4294901760
    %v497 = vsub.f32 %v267, %v496
    %v498 = vand.u32 %v497, 4294901760
    %499 = vmatmul.f32.gmra.mxu0 %v498
    %v500 = vpop.f32.mrf.mxu0
    %v501 = vadd.f32 %v462, %v500
    %502 = vdwg.mxu0
    %v503 = vand.u32 %v111, 4294901760
    %v504 = vsub.f32 %v111, %v503
    %v505 = vand.u32 %v504, 4294901760
    %506 = vmatpush.msra.mxu0 %v505
    %v507 = vand.u32 %v110, 4294901760
    %v508 = vsub.f32 %v110, %v507
    %v509 = vand.u32 %v508, 4294901760
    %510 = vmatpush.msra.mxu0 %v509
    %v511 = vand.u32 %v109, 4294901760
    %v512 = vsub.f32 %v109, %v511
    %v513 = vand.u32 %v512, 4294901760
    %514 = vmatpush.msra.mxu0 %v513
    %v515 = vand.u32 %v108, 4294901760
    %v516 = vsub.f32 %v108, %v515
    %v517 = vand.u32 %v516, 4294901760
    %518 = vmatpush.msra.mxu0 %v517
    %v519 = vand.u32 %v107, 4294901760
    %v520 = vsub.f32 %v107, %v519
    %v521 = vand.u32 %v520, 4294901760
    %522 = vmatpush.msra.mxu0 %v521
    %v523 = vand.u32 %v106, 4294901760
    %v524 = vsub.f32 %v106, %v523
    %v525 = vand.u32 %v524, 4294901760
    %526 = vmatpush.msra.mxu0 %v525
    %v527 = vand.u32 %v105, 4294901760
    %v528 = vsub.f32 %v105, %v527
    %v529 = vand.u32 %v528, 4294901760
    %530 = vmatpush.msra.mxu0 %v529
    %v531 = vand.u32 %v104, 4294901760
    %v532 = vsub.f32 %v104, %v531
    %v533 = vand.u32 %v532, 4294901760
    %534 = vmatpush.msra.mxu0 %v533
    %v535 = vand.u32 %v103, 4294901760
    %v536 = vsub.f32 %v103, %v535
    %v537 = vand.u32 %v536, 4294901760
    %538 = vmatpush.msra.mxu0 %v537
    %v539 = vand.u32 %v102, 4294901760
    %v540 = vsub.f32 %v102, %v539
    %v541 = vand.u32 %v540, 4294901760
    %542 = vmatpush.msra.mxu0 %v541
    %v543 = vand.u32 %v101, 4294901760
    %v544 = vsub.f32 %v101, %v543
    %v545 = vand.u32 %v544, 4294901760
    %546 = vmatpush.msra.mxu0 %v545
    %v547 = vand.u32 %v100, 4294901760
    %v548 = vsub.f32 %v100, %v547
    %v549 = vand.u32 %v548, 4294901760
    %550 = vmatpush.msra.mxu0 %v549
    %v551 = vand.u32 %v99, 4294901760
    %v552 = vsub.f32 %v99, %v551
    %v553 = vand.u32 %v552, 4294901760
    %554 = vmatpush.msra.mxu0 %v553
    %v555 = vand.u32 %v98, 4294901760
    %v556 = vsub.f32 %v98, %v555
    %v557 = vand.u32 %v556, 4294901760
    %558 = vmatpush.msra.mxu0 %v557
    %v559 = vand.u32 %v97, 4294901760
    %v560 = vsub.f32 %v97, %v559
    %v561 = vand.u32 %v560, 4294901760
    %562 = vmatpush.msra.mxu0 %v561
    %v563 = vand.u32 %v96, 4294901760
    %v564 = vsub.f32 %v96, %v563
    %v565 = vand.u32 %v564, 4294901760
    %566 = vmatpush.msra.mxu0 %v565
    %v567 = vand.u32 %v267, 4294901760
    %568 = vmatmul.f32.gmra.mxu0 %v567
    %v569 = vpop.f32.mrf.mxu0
    %v570 = vadd.f32 %v501, %v569
    %571 = vdwg.mxu0
    %v572 = vand.u32 %v111, 4294901760
    %573 = vmatpush.msra.mxu0 %v572
    %v574 = vand.u32 %v110, 4294901760
    %575 = vmatpush.msra.mxu0 %v574
    %v576 = vand.u32 %v109, 4294901760
    %577 = vmatpush.msra.mxu0 %v576
    %v578 = vand.u32 %v108, 4294901760
    %579 = vmatpush.msra.mxu0 %v578
    %v580 = vand.u32 %v107, 4294901760
    %581 = vmatpush.msra.mxu0 %v580
    %v582 = vand.u32 %v106, 4294901760
    %583 = vmatpush.msra.mxu0 %v582
    %v584 = vand.u32 %v105, 4294901760
    %585 = vmatpush.msra.mxu0 %v584
    %v586 = vand.u32 %v104, 4294901760
    %587 = vmatpush.msra.mxu0 %v586
    %v588 = vand.u32 %v103, 4294901760
    %589 = vmatpush.msra.mxu0 %v588
    %v590 = vand.u32 %v102, 4294901760
    %591 = vmatpush.msra.mxu0 %v590
    %v592 = vand.u32 %v101, 4294901760
    %593 = vmatpush.msra.mxu0 %v592
    %v594 = vand.u32 %v100, 4294901760
    %595 = vmatpush.msra.mxu0 %v594
    %v596 = vand.u32 %v99, 4294901760
    %597 = vmatpush.msra.mxu0 %v596
    %v598 = vand.u32 %v98, 4294901760
    %599 = vmatpush.msra.mxu0 %v598
    %v600 = vand.u32 %v97, 4294901760
    %601 = vmatpush.msra.mxu0 %v600
    %v602 = vand.u32 %v96, 4294901760
    %603 = vmatpush.msra.mxu0 %v602
    %v604 = vand.u32 %v267, 4294901760
    %605 = vmatmul.f32.gmra.mxu0 %v604
    %v606 = vpop.f32.mrf.mxu0
    %v607 = vadd.f32 %v570, %v606
    %608 = vdwg.mxu0
    %v609 = vsub.f32 %v267, %v607
    %v610 = vmul.f32 %v609, %v609
    %v611 = vand.u32 %v111, 4294901760
    %612 = vmatpush.msra.mxu0 %v611
    %v613 = vand.u32 %v110, 4294901760
    %614 = vmatpush.msra.mxu0 %v613
    %v615 = vand.u32 %v109, 4294901760
    %616 = vmatpush.msra.mxu0 %v615
    %v617 = vand.u32 %v108, 4294901760
    %618 = vmatpush.msra.mxu0 %v617
    %v619 = vand.u32 %v107, 4294901760
    %620 = vmatpush.msra.mxu0 %v619
    %v621 = vand.u32 %v106, 4294901760
    %622 = vmatpush.msra.mxu0 %v621
    %v623 = vand.u32 %v105, 4294901760
    %624 = vmatpush.msra.mxu0 %v623
    %v625 = vand.u32 %v104, 4294901760
    %626 = vmatpush.msra.mxu0 %v625
    %v627 = vand.u32 %v103, 4294901760
    %628 = vmatpush.msra.mxu0 %v627
    %v629 = vand.u32 %v102, 4294901760
    %630 = vmatpush.msra.mxu0 %v629
    %v631 = vand.u32 %v101, 4294901760
    %632 = vmatpush.msra.mxu0 %v631
    %v633 = vand.u32 %v100, 4294901760
    %634 = vmatpush.msra.mxu0 %v633
    %v635 = vand.u32 %v99, 4294901760
    %636 = vmatpush.msra.mxu0 %v635
    %v637 = vand.u32 %v98, 4294901760
    %638 = vmatpush.msra.mxu0 %v637
    %v639 = vand.u32 %v97, 4294901760
    %640 = vmatpush.msra.mxu0 %v639
    %v641 = vand.u32 %v96, 4294901760
    %642 = vmatpush.msra.mxu0 %v641
    %v643 = vand.u32 %v610, 4294901760
    %v644 = vsub.f32 %v610, %v643
    %v645 = vand.u32 %v644, 4294901760
    %v646 = vsub.f32 %v644, %v645
    %v647 = vand.u32 %v646, 4294901760
    %648 = vmatmul.f32.gmra.mxu0 %v647
    %v649 = vpop.f32.mrf.mxu0
    %v650 = vadd.f32 1e-05, %v649
    %651 = vdwg.mxu0
    %v652 = vand.u32 %v111, 4294901760
    %v653 = vsub.f32 %v111, %v652
    %v654 = vand.u32 %v653, 4294901760
    %v655 = vsub.f32 %v653, %v654
    %v656 = vand.u32 %v655, 4294901760
    %657 = vmatpush.msra.mxu0 %v656
    %v658 = vand.u32 %v110, 4294901760
    %v659 = vsub.f32 %v110, %v658
    %v660 = vand.u32 %v659, 4294901760
    %v661 = vsub.f32 %v659, %v660
    %v662 = vand.u32 %v661, 4294901760
    %663 = vmatpush.msra.mxu0 %v662
    %v664 = vand.u32 %v109, 4294901760
    %v665 = vsub.f32 %v109, %v664
    %v666 = vand.u32 %v665, 4294901760
    %v667 = vsub.f32 %v665, %v666
    %v668 = vand.u32 %v667, 4294901760
    %669 = vmatpush.msra.mxu0 %v668
    %v670 = vand.u32 %v108, 4294901760
    %v671 = vsub.f32 %v108, %v670
    %v672 = vand.u32 %v671, 4294901760
    %v673 = vsub.f32 %v671, %v672
    %v674 = vand.u32 %v673, 4294901760
    %675 = vmatpush.msra.mxu0 %v674
    %v676 = vand.u32 %v107, 4294901760
    %v677 = vsub.f32 %v107, %v676
    %v678 = vand.u32 %v677, 4294901760
    %v679 = vsub.f32 %v677, %v678
    %v680 = vand.u32 %v679, 4294901760
    %681 = vmatpush.msra.mxu0 %v680
    %v682 = vand.u32 %v106, 4294901760
    %v683 = vsub.f32 %v106, %v682
    %v684 = vand.u32 %v683, 4294901760
    %v685 = vsub.f32 %v683, %v684
    %v686 = vand.u32 %v685, 4294901760
    %687 = vmatpush.msra.mxu0 %v686
    %v688 = vand.u32 %v105, 4294901760
    %v689 = vsub.f32 %v105, %v688
    %v690 = vand.u32 %v689, 4294901760
    %v691 = vsub.f32 %v689, %v690
    %v692 = vand.u32 %v691, 4294901760
    %693 = vmatpush.msra.mxu0 %v692
    %v694 = vand.u32 %v104, 4294901760
    %v695 = vsub.f32 %v104, %v694
    %v696 = vand.u32 %v695, 4294901760
    %v697 = vsub.f32 %v695, %v696
    %v698 = vand.u32 %v697, 4294901760
    %699 = vmatpush.msra.mxu0 %v698
    %v700 = vand.u32 %v103, 4294901760
    %v701 = vsub.f32 %v103, %v700
    %v702 = vand.u32 %v701, 4294901760
    %v703 = vsub.f32 %v701, %v702
    %v704 = vand.u32 %v703, 4294901760
    %705 = vmatpush.msra.mxu0 %v704
    %v706 = vand.u32 %v102, 4294901760
    %v707 = vsub.f32 %v102, %v706
    %v708 = vand.u32 %v707, 4294901760
    %v709 = vsub.f32 %v707, %v708
    %v710 = vand.u32 %v709, 4294901760
    %711 = vmatpush.msra.mxu0 %v710
    %v712 = vand.u32 %v101, 4294901760
    %v713 = vsub.f32 %v101, %v712
    %v714 = vand.u32 %v713, 4294901760
    %v715 = vsub.f32 %v713, %v714
    %v716 = vand.u32 %v715, 4294901760
    %717 = vmatpush.msra.mxu0 %v716
    %v718 = vand.u32 %v100, 4294901760
    %v719 = vsub.f32 %v100, %v718
    %v720 = vand.u32 %v719, 4294901760
    %v721 = vsub.f32 %v719, %v720
    %v722 = vand.u32 %v721, 4294901760
    %723 = vmatpush.msra.mxu0 %v722
    %v724 = vand.u32 %v99, 4294901760
    %v725 = vsub.f32 %v99, %v724
    %v726 = vand.u32 %v725, 4294901760
    %v727 = vsub.f32 %v725, %v726
    %v728 = vand.u32 %v727, 4294901760
    %729 = vmatpush.msra.mxu0 %v728
    %v730 = vand.u32 %v98, 4294901760
    %v731 = vsub.f32 %v98, %v730
    %v732 = vand.u32 %v731, 4294901760
    %v733 = vsub.f32 %v731, %v732
    %v734 = vand.u32 %v733, 4294901760
    %735 = vmatpush.msra.mxu0 %v734
    %v736 = vand.u32 %v97, 4294901760
    %v737 = vsub.f32 %v97, %v736
    %v738 = vand.u32 %v737, 4294901760
    %v739 = vsub.f32 %v737, %v738
    %v740 = vand.u32 %v739, 4294901760
    %741 = vmatpush.msra.mxu0 %v740
    %v742 = vand.u32 %v96, 4294901760
    %v743 = vsub.f32 %v96, %v742
    %v744 = vand.u32 %v743, 4294901760
    %v745 = vsub.f32 %v743, %v744
    %v746 = vand.u32 %v745, 4294901760
    %747 = vmatpush.msra.mxu0 %v746
    %v748 = vand.u32 %v610, 4294901760
    %749 = vmatmul.f32.gmra.mxu0 %v748
    %v750 = vpop.f32.mrf.mxu0
    %v751 = vadd.f32 %v650, %v750
    %752 = vdwg.mxu0
    %v753 = vand.u32 %v111, 4294901760
    %v754 = vsub.f32 %v111, %v753
    %755 = vmatpush.msra.mxu0 %v754
    %v756 = vand.u32 %v110, 4294901760
    %v757 = vsub.f32 %v110, %v756
    %758 = vmatpush.msra.mxu0 %v757
    %v759 = vand.u32 %v109, 4294901760
    %v760 = vsub.f32 %v109, %v759
    %761 = vmatpush.msra.mxu0 %v760
    %v762 = vand.u32 %v108, 4294901760
    %v763 = vsub.f32 %v108, %v762
    %764 = vmatpush.msra.mxu0 %v763
    %v765 = vand.u32 %v107, 4294901760
    %v766 = vsub.f32 %v107, %v765
    %767 = vmatpush.msra.mxu0 %v766
    %v768 = vand.u32 %v106, 4294901760
    %v769 = vsub.f32 %v106, %v768
    %770 = vmatpush.msra.mxu0 %v769
    %v771 = vand.u32 %v105, 4294901760
    %v772 = vsub.f32 %v105, %v771
    %773 = vmatpush.msra.mxu0 %v772
    %v774 = vand.u32 %v104, 4294901760
    %v775 = vsub.f32 %v104, %v774
    %776 = vmatpush.msra.mxu0 %v775
    %v777 = vand.u32 %v103, 4294901760
    %v778 = vsub.f32 %v103, %v777
    %779 = vmatpush.msra.mxu0 %v778
    %v780 = vand.u32 %v102, 4294901760
    %v781 = vsub.f32 %v102, %v780
    %782 = vmatpush.msra.mxu0 %v781
    %v783 = vand.u32 %v101, 4294901760
    %v784 = vsub.f32 %v101, %v783
    %785 = vmatpush.msra.mxu0 %v784
    %v786 = vand.u32 %v100, 4294901760
    %v787 = vsub.f32 %v100, %v786
    %788 = vmatpush.msra.mxu0 %v787
    %v789 = vand.u32 %v99, 4294901760
    %v790 = vsub.f32 %v99, %v789
    %791 = vmatpush.msra.mxu0 %v790
    %v792 = vand.u32 %v98, 4294901760
    %v793 = vsub.f32 %v98, %v792
    %794 = vmatpush.msra.mxu0 %v793
    %v795 = vand.u32 %v97, 4294901760
    %v796 = vsub.f32 %v97, %v795
    %797 = vmatpush.msra.mxu0 %v796
    %v798 = vand.u32 %v96, 4294901760
    %v799 = vsub.f32 %v96, %v798
    %800 = vmatpush.msra.mxu0 %v799
    %v801 = vand.u32 %v610, 4294901760
    %v802 = vsub.f32 %v610, %v801
    %803 = vmatmul.f32.gmra.mxu0 %v802
    %v804 = vpop.f32.mrf.mxu0
    %v805 = vadd.f32 %v751, %v804
    %806 = vdwg.mxu0
    %v807 = vand.u32 %v111, 4294901760
    %808 = vmatpush.msra.mxu0 %v807
    %v809 = vand.u32 %v110, 4294901760
    %810 = vmatpush.msra.mxu0 %v809
    %v811 = vand.u32 %v109, 4294901760
    %812 = vmatpush.msra.mxu0 %v811
    %v813 = vand.u32 %v108, 4294901760
    %814 = vmatpush.msra.mxu0 %v813
    %v815 = vand.u32 %v107, 4294901760
    %816 = vmatpush.msra.mxu0 %v815
    %v817 = vand.u32 %v106, 4294901760
    %818 = vmatpush.msra.mxu0 %v817
    %v819 = vand.u32 %v105, 4294901760
    %820 = vmatpush.msra.mxu0 %v819
    %v821 = vand.u32 %v104, 4294901760
    %822 = vmatpush.msra.mxu0 %v821
    %v823 = vand.u32 %v103, 4294901760
    %824 = vmatpush.msra.mxu0 %v823
    %v825 = vand.u32 %v102, 4294901760
    %826 = vmatpush.msra.mxu0 %v825
    %v827 = vand.u32 %v101, 4294901760
    %828 = vmatpush.msra.mxu0 %v827
    %v829 = vand.u32 %v100, 4294901760
    %830 = vmatpush.msra.mxu0 %v829
    %v831 = vand.u32 %v99, 4294901760
    %832 = vmatpush.msra.mxu0 %v831
    %v833 = vand.u32 %v98, 4294901760
    %834 = vmatpush.msra.mxu0 %v833
    %v835 = vand.u32 %v97, 4294901760
    %836 = vmatpush.msra.mxu0 %v835
    %v837 = vand.u32 %v96, 4294901760
    %838 = vmatpush.msra.mxu0 %v837
    %v839 = vand.u32 %v610, 4294901760
    %v840 = vsub.f32 %v610, %v839
    %v841 = vand.u32 %v840, 4294901760
    %842 = vmatmul.f32.gmra.mxu0 %v841
    %v843 = vpop.f32.mrf.mxu0
    %v844 = vadd.f32 %v805, %v843
    %845 = vdwg.mxu0
    %v846 = vand.u32 %v111, 4294901760
    %v847 = vsub.f32 %v111, %v846
    %v848 = vand.u32 %v847, 4294901760
    %849 = vmatpush.msra.mxu0 %v848
    %v850 = vand.u32 %v110, 4294901760
    %v851 = vsub.f32 %v110, %v850
    %v852 = vand.u32 %v851, 4294901760
    %853 = vmatpush.msra.mxu0 %v852
    %v854 = vand.u32 %v109, 4294901760
    %v855 = vsub.f32 %v109, %v854
    %v856 = vand.u32 %v855, 4294901760
    %857 = vmatpush.msra.mxu0 %v856
    %v858 = vand.u32 %v108, 4294901760
    %v859 = vsub.f32 %v108, %v858
    %v860 = vand.u32 %v859, 4294901760
    %861 = vmatpush.msra.mxu0 %v860
    %v862 = vand.u32 %v107, 4294901760
    %v863 = vsub.f32 %v107, %v862
    %v864 = vand.u32 %v863, 4294901760
    %865 = vmatpush.msra.mxu0 %v864
    %v866 = vand.u32 %v106, 4294901760
    %v867 = vsub.f32 %v106, %v866
    %v868 = vand.u32 %v867, 4294901760
    %869 = vmatpush.msra.mxu0 %v868
    %v870 = vand.u32 %v105, 4294901760
    %v871 = vsub.f32 %v105, %v870
    %v872 = vand.u32 %v871, 4294901760
    %873 = vmatpush.msra.mxu0 %v872
    %v874 = vand.u32 %v104, 4294901760
    %v875 = vsub.f32 %v104, %v874
    %v876 = vand.u32 %v875, 4294901760
    %877 = vmatpush.msra.mxu0 %v876
    %v878 = vand.u32 %v103, 4294901760
    %v879 = vsub.f32 %v103, %v878
    %v880 = vand.u32 %v879, 4294901760
    %881 = vmatpush.msra.mxu0 %v880
    %v882 = vand.u32 %v102, 4294901760
    %v883 = vsub.f32 %v102, %v882
    %v884 = vand.u32 %v883, 4294901760
    %885 = vmatpush.msra.mxu0 %v884
    %v886 = vand.u32 %v101, 4294901760
    %v887 = vsub.f32 %v101, %v886
    %v888 = vand.u32 %v887, 4294901760
    %889 = vmatpush.msra.mxu0 %v888
    %v890 = vand.u32 %v100, 4294901760
    %v891 = vsub.f32 %v100, %v890
    %v892 = vand.u32 %v891, 4294901760
    %893 = vmatpush.msra.mxu0 %v892
    %v894 = vand.u32 %v99, 4294901760
    %v895 = vsub.f32 %v99, %v894
    %v896 = vand.u32 %v895, 4294901760
    %897 = vmatpush.msra.mxu0 %v896
    %v898 = vand.u32 %v98, 4294901760
    %v899 = vsub.f32 %v98, %v898
    %v900 = vand.u32 %v899, 4294901760
    %901 = vmatpush.msra.mxu0 %v900
    %v902 = vand.u32 %v97, 4294901760
    %v903 = vsub.f32 %v97, %v902
    %v904 = vand.u32 %v903, 4294901760
    %905 = vmatpush.msra.mxu0 %v904
    %v906 = vand.u32 %v96, 4294901760
    %v907 = vsub.f32 %v96, %v906
    %v908 = vand.u32 %v907, 4294901760
    %909 = vmatpush.msra.mxu0 %v908
    %v910 = vand.u32 %v610, 4294901760
    %911 = vmatmul.f32.gmra.mxu0 %v910
    %v912 = vpop.f32.mrf.mxu0
    %v913 = vadd.f32 %v844, %v912
    %914 = vdwg.mxu0
    %v915 = vand.u32 %v111, 4294901760
    %916 = vmatpush.msra.mxu0 %v915
    %v917 = vand.u32 %v110, 4294901760
    %918 = vmatpush.msra.mxu0 %v917
    %v919 = vand.u32 %v109, 4294901760
    %920 = vmatpush.msra.mxu0 %v919
    %v921 = vand.u32 %v108, 4294901760
    %922 = vmatpush.msra.mxu0 %v921
    %v923 = vand.u32 %v107, 4294901760
    %924 = vmatpush.msra.mxu0 %v923
    %v925 = vand.u32 %v106, 4294901760
    %926 = vmatpush.msra.mxu0 %v925
    %v927 = vand.u32 %v105, 4294901760
    %928 = vmatpush.msra.mxu0 %v927
    %v929 = vand.u32 %v104, 4294901760
    %930 = vmatpush.msra.mxu0 %v929
    %v931 = vand.u32 %v103, 4294901760
    %932 = vmatpush.msra.mxu0 %v931
    %v933 = vand.u32 %v102, 4294901760
    %934 = vmatpush.msra.mxu0 %v933
    %v935 = vand.u32 %v101, 4294901760
    %936 = vmatpush.msra.mxu0 %v935
    %v937 = vand.u32 %v100, 4294901760
    %938 = vmatpush.msra.mxu0 %v937
    %v939 = vand.u32 %v99, 4294901760
    %940 = vmatpush.msra.mxu0 %v939
    %v941 = vand.u32 %v98, 4294901760
    %942 = vmatpush.msra.mxu0 %v941
    %v943 = vand.u32 %v97, 4294901760
    %944 = vmatpush.msra.mxu0 %v943
    %v945 = vand.u32 %v96, 4294901760
    %946 = vmatpush.msra.mxu0 %v945
    %v947 = vand.u32 %v610, 4294901760
    %948 = vmatmul.f32.gmra.mxu0 %v947
    %v949 = vpop.f32.mrf.mxu0
    %v950 = vadd.f32 %v913, %v949
    %951 = vdwg.mxu0
    %v952 = vrsqrt.pop %v950
    %v953 = vmul.f32 %v952, %v950
    %v954 = vmul.f32 %v953, %v952
    %v955 = vmul.f32 0.5, %v954
    %v956 = vsub.f32 1.5, %v955
    %v957 = vmul.f32 %v952, %v956
    %vm958 = vweird.f32 %v950
    %vm959 = vweird.f32 %v952
    %vm960 = vmor %vm958, %vm959
    %v961 = vsel %vm960, %v952, %v957
    %v962 = vmul.f32 %v609, %v961
    %v963 = vperm.slane %v95, 2
    %v964 = vmul.f32 %v962, %v963
    %v965 = vperm.slane %v95, 3
    %v966 = vadd.f32 %v964, %v965
    %967 = vst [vmem:[#allocation11] sm:$0x3] %v966
    // Predicated region
    $region42: #{tpu_custom_call.1} parent=1 // pred_check
      _
    $region43: #{tpu_custom_call.1} parent=1 // pred_check_branch
      %969 = sbr.rel (0) target = $region45
    $region44: #{tpu_custom_call.1} parent=1 // pred_region
      %971 = vsyncadd [#allocation4], 0
      %s973 = sshll.u32 [#allocation11], 4
      %s974 = int_to_ptr.vmem [resolvable:$true] %s973
      %s975 = sshll.u32 %s5, 4
      %s976 = int_to_ptr.hbm [resolvable:$true] %s975
      %978 = dma.vmem_to_hbm [thread:$0]  %s974, 32, %s976, [#allocation4]
    $region45: #{tpu_custom_call.1} parent=1 // pred_fallthru
      _
    // Predicated region
    $region46: #{tpu_custom_call.1} parent=1 // pred_check
      _
    $region47: #{tpu_custom_call.1} parent=1 // pred_check_branch
      %980 = sbr.rel (0) target = $region49
    $region48: #{tpu_custom_call.1} parent=1 // pred_region
      %982 = dma.done [#allocation4], 32
    $region49: #{tpu_custom_call.1} parent=1 // pred_fallthru
      _
    %983 = vsyncpa [#allocation3], 1
    %984 = vsyncpa [#allocation6], 1
    %985 = vsyncpa [#allocation9], 1
    %986 = vsyncpa [#allocation4], 1

// kernel: tpu_custom_call.1
$region0: #{tpu_custom_call.1}
  #allocation0 [shape = 'u32[]', space=smem, size = 0x4, offset = 0x4, fixed_abs, tag = 'smem constant byte address 0x4 - core index']
  #allocation1 [shape = 'u32[72,128]{1,0:T(1,128)}', space=vmem, size = 0x9000, scoped, tag = 'internal scratch']
  %s0 = inlined_call_operand.hbm [shape: f32[2,128], index: 0, kind: input, shape index: {}]
  %s1 = inlined_call_operand.hbm [shape: f32[128,256], index: 1, kind: input, shape index: {}]
  %s2 = inlined_call_operand.hbm [shape: f32[256,128], index: 2, kind: input, shape index: {}]
  %s3 = inlined_call_operand.hbm [shape: f32[128,128], index: 3, kind: input, shape index: {}]
  %s4 = inlined_call_operand.hbm [shape: f32[4,256], index: 4, kind: input, shape index: {}]
  %s5 = inlined_call_operand.hbm [shape: f32[2,128], index: 5, kind: output, shape index: {}]
  %s6 = sld [smem:[#allocation0]]
  $region50: #{tpu_custom_call.1} parent=0
    _
  %s8 = ssub.s32 1, %s6
  %s9 = scalar_select 0, %s8, %s6
  $region1: #{tpu_custom_call.1} parent=0
    #allocation2 [shape = 'u8[1024]{0}', space=vmem, size = 0x400, scoped, tag = 'input window, operand 0, single buffered']
    #allocation3 [shape = 's32[1]{0}', space=sflag, size = 0x4, scoped, tag = 'scoped memory for tpu_custom_call.1']
    #allocation4 [shape = 's32[1]{0}', space=sflag, size = 0x4, scoped, tag = 'scoped memory for tpu_custom_call.1']
    #allocation5 [shape = 'u8[131072]{0}', space=vmem, size = 0x20000, scoped, tag = 'input window, operand 1, single buffered']
    #allocation6 [shape = 's32[1]{0}', space=sflag, size = 0x4, scoped, tag = 'scoped memory for tpu_custom_call.1']
    #allocation7 [shape = 'u8[131072]{0}', space=vmem, size = 0x20000, scoped, tag = 'input window, operand 2, single buffered']
    #allocation8 [shape = 'u8[65536]{0}', space=vmem, size = 0x10000, scoped, tag = 'input window, operand 3, single buffered']
    #allocation9 [shape = 's32[1]{0}', space=sflag, size = 0x4, scoped, tag = 'scoped memory for tpu_custom_call.1']
    #allocation10 [shape = 'u8[4096]{0}', space=vmem, size = 0x1000, scoped, tag = 'input window, operand 4, single buffered']
    #allocation11 [shape = 'u8[1024]{0}', space=vmem, size = 0x400, scoped, tag = 'output window, operand 0, single buffered']
    %10 = vsyncpa [#allocation3], 0
    %11 = vsyncpa [#allocation6], 0
    %12 = vsyncpa [#allocation9], 0
    %13 = vsyncpa [#allocation4], 0
    // Predicated region
    $region2: #{tpu_custom_call.1} parent=1 // pred_check
      _
    $region3: #{tpu_custom_call.1} parent=1 // pred_check_branch
      %15 = sbr.rel (0) target = $region5
    $region4: #{tpu_custom_call.1} parent=1 // pred_region
      %17 = vsyncadd [#allocation3], 0
      %s19 = sshll.u32 %s0, 4
      %s20 = int_to_ptr.hbm [resolvable:$true] %s19
      %s21 = sshll.u32 [#allocation2], 4
      %s22 = int_to_ptr.vmem [resolvable:$true] %s21
      %24 = dma.hbm_to_vmem [thread:$0]  %s20, 32, %s22, [#allocation3]
    $region5: #{tpu_custom_call.1} parent=1 // pred_fallthru
      _
    // Predicated region
    $region6: #{tpu_custom_call.1} parent=1 // pred_check
      _
    $region7: #{tpu_custom_call.1} parent=1 // pred_check_branch
      %26 = sbr.rel (0) target = $region9
    $region8: #{tpu_custom_call.1} parent=1 // pred_region
      %28 = vsyncadd [#allocation6], 0
      %s29 = sshll.u32 %s1, 4
      %s30 = int_to_ptr.hbm [resolvable:$true] %s29
      %s31 = sshll.u32 [#allocation5], 4
      %s32 = int_to_ptr.vmem [resolvable:$true] %s31
      %37 = dma.hbm_to_vmem [thread:$0]  %s30, 4096, %s32, [#allocation6], 256, 256, 16
    $region9: #{tpu_custom_call.1} parent=1 // pred_fallthru
      _
    // Predicated region
    $region10: #{tpu_custom_call.1} parent=1 // pred_check
      _
    $region11: #{tpu_custom_call.1} parent=1 // pred_check_branch
      %39 = sbr.rel (0) target = $region13
    $region12: #{tpu_custom_call.1} parent=1 // pred_region
      %41 = vsyncadd [#allocation6], 0
      %s42 = sshll.u32 %s2, 4
      %s43 = int_to_ptr.hbm [resolvable:$true] %s42
      %s44 = sshll.u32 [#allocation7], 4
      %s45 = int_to_ptr.vmem [resolvable:$true] %s44
      %50 = dma.hbm_to_vmem [thread:$0]  %s43, 4096, %s45, [#allocation6], 128, 128, 8
    $region13: #{tpu_custom_call.1} parent=1 // pred_fallthru
      _
    // Predicated region
    $region14: #{tpu_custom_call.1} parent=1 // pred_check
      _
    $region15: #{tpu_custom_call.1} parent=1 // pred_check_branch
      %52 = sbr.rel (0) target = $region17
    $region16: #{tpu_custom_call.1} parent=1 // pred_region
      %54 = vsyncadd [#allocation9], 0
      %s55 = sshll.u32 %s3, 4
      %s56 = int_to_ptr.hbm [resolvable:$true] %s55
      %s57 = sshll.u32 [#allocation8], 4
      %s58 = int_to_ptr.vmem [resolvable:$true] %s57
      %63 = dma.hbm_to_vmem [thread:$0]  %s56, 2048, %s58, [#allocation9], 128, 128, 8
    $region17: #{tpu_custom_call.1} parent=1 // pred_fallthru
      _
    // Predicated region
    $region18: #{tpu_custom_call.1} parent=1 // pred_check
      _
    $region19: #{tpu_custom_call.1} parent=1 // pred_check_branch
      %65 = sbr.rel (0) target = $region21
    $region20: #{tpu_custom_call.1} parent=1 // pred_region
      %67 = vsyncadd [#allocation9], 0
      %s69 = sshll.u32 %s4, 4
      %s70 = int_to_ptr.hbm [resolvable:$true] %s69
      %s71 = sshll.u32 [#allocation10], 4
      %s72 = int_to_ptr.vmem [resolvable:$true] %s71
      %74 = dma.hbm_to_vmem [thread:$0]  %s70, 128, %s72, [#allocation9]
    $region21: #{tpu_custom_call.1} parent=1 // pred_fallthru
      _
    // Predicated region
    $region22: #{tpu_custom_call.1} parent=1 // pred_check
      _
    $region23: #{tpu_custom_call.1} parent=1 // pred_check_branch
      %76 = sbr.rel (0) target = $region25
    $region24: #{tpu_custom_call.1} parent=1 // pred_region
      %78 = dma.done [#allocation3], 32
    $region25: #{tpu_custom_call.1} parent=1 // pred_fallthru
      _
    // Predicated region
    $region26: #{tpu_custom_call.1} parent=1 // pred_check
      _
    $region27: #{tpu_custom_call.1} parent=1 // pred_check_branch
      %80 = sbr.rel (0) target = $region29
    $region28: #{tpu_custom_call.1} parent=1 // pred_region
      %82 = dma.done [#allocation6], 4096
    $region29: #{tpu_custom_call.1} parent=1 // pred_fallthru
      _
    // Predicated region
    $region30: #{tpu_custom_call.1} parent=1 // pred_check
      _
    $region31: #{tpu_custom_call.1} parent=1 // pred_check_branch
      %84 = sbr.rel (0) target = $region33
    $region32: #{tpu_custom_call.1} parent=1 // pred_region
      %86 = dma.done [#allocation6], 4096
    $region33: #{tpu_custom_call.1} parent=1 // pred_fallthru
      _
    // Predicated region
    $region34: #{tpu_custom_call.1} parent=1 // pred_check
      _
    $region35: #{tpu_custom_call.1} parent=1 // pred_check_branch
      %88 = sbr.rel (0) target = $region37
    $region36: #{tpu_custom_call.1} parent=1 // pred_region
      %90 = dma.done [#allocation9], 2048
    $region37: #{tpu_custom_call.1} parent=1 // pred_fallthru
      _
    // Predicated region
    $region38: #{tpu_custom_call.1} parent=1 // pred_check
      _
    $region39: #{tpu_custom_call.1} parent=1 // pred_check_branch
      %92 = sbr.rel (0) target = $region41
    $region40: #{tpu_custom_call.1} parent=1 // pred_region
      %94 = dma.done [#allocation9], 128
    $region41: #{tpu_custom_call.1} parent=1 // pred_fallthru
      _
    %v95 = vld [vmem:[#allocation10] sm:$0xff]
    %v96 = vld [vmem:[#allocation8] sm:$0xff]
    %v97 = vld [vmem:[#allocation8 + $0x8] sm:$0xff]
    %v98 = vld [vmem:[#allocation8 + $0x10] sm:$0xff]
    %v99 = vld [vmem:[#allocation8 + $0x18] sm:$0xff]
    %v100 = vld [vmem:[#allocation8 + $0x20] sm:$0xff]
    %v101 = vld [vmem:[#allocation8 + $0x28] sm:$0xff]
    %v102 = vld [vmem:[#allocation8 + $0x30] sm:$0xff]
    %v103 = vld [vmem:[#allocation8 + $0x38] sm:$0xff]
    %v104 = vld [vmem:[#allocation8 + $0x40] sm:$0xff]
    %v105 = vld [vmem:[#allocation8 + $0x48] sm:$0xff]
    %v106 = vld [vmem:[#allocation8 + $0x50] sm:$0xff]
    %v107 = vld [vmem:[#allocation8 + $0x58] sm:$0xff]
    %v108 = vld [vmem:[#allocation8 + $0x60] sm:$0xff]
    %v109 = vld [vmem:[#allocation8 + $0x68] sm:$0xff]
    %v110 = vld [vmem:[#allocation8 + $0x70] sm:$0xff]
    %v111 = vld [vmem:[#allocation8 + $0x78] sm:$0xff]
    %v112 = vld [vmem:[#allocation2] sm:$0x3]
    %v113 = vld [vmem:[#allocation5] sm:$0xff]
    %v114 = vld [vmem:[#allocation5 + $0x8] sm:$0xff]
    %v115 = vld [vmem:[#allocation5 + $0x10] sm:$0xff]
    %v116 = vld [vmem:[#allocation5 + $0x18] sm:$0xff]
    %v117 = vld [vmem:[#allocation5 + $0x20] sm:$0xff]
    %v118 = vld [vmem:[#allocation5 + $0x28] sm:$0xff]
    %v119 = vld [vmem:[#allocation5 + $0x30] sm:$0xff]
    %v120 = vld [vmem:[#allocation5 + $0x38] sm:$0xff]
    %v121 = vld [vmem:[#allocation5 + $0x40] sm:$0xff]
    %v122 = vld [vmem:[#allocation5 + $0x48] sm:$0xff]
    %v123 = vld [vmem:[#allocation5 + $0x50] sm:$0xff]
    %v124 = vld [vmem:[#allocation5 + $0x58] sm:$0xff]
    %v125 = vld [vmem:[#allocation5 + $0x60] sm:$0xff]
    %v126 = vld [vmem:[#allocation5 + $0x68] sm:$0xff]
    %v127 = vld [vmem:[#allocation5 + $0x70] sm:$0xff]
    %v128 = vld [vmem:[#allocation5 + $0x78] sm:$0xff]
    %v129 = vld [vmem:[#allocation5 + $0x80] sm:$0xff]
    %v130 = vld [vmem:[#allocation5 + $0x88] sm:$0xff]
    %v131 = vld [vmem:[#allocation5 + $0x90] sm:$0xff]
    %v132 = vld [vmem:[#allocation5 + $0x98] sm:$0xff]
    %v133 = vld [vmem:[#allocation5 + $0xa0] sm:$0xff]
    %v134 = vld [vmem:[#allocation5 + $0xa8] sm:$0xff]
    %v135 = vld [vmem:[#allocation5 + $0xb0] sm:$0xff]
    %v136 = vld [vmem:[#allocation5 + $0xb8] sm:$0xff]
    %v137 = vld [vmem:[#allocation5 + $0xc0] sm:$0xff]
    %v138 = vld [vmem:[#allocation5 + $0xc8] sm:$0xff]
    %v139 = vld [vmem:[#allocation5 + $0xd0] sm:$0xff]
    %v140 = vld [vmem:[#allocation5 + $0xd8] sm:$0xff]
    %v141 = vld [vmem:[#allocation5 + $0xe0] sm:$0xff]
    %v142 = vld [vmem:[#allocation5 + $0xe8] sm:$0xff]
    %v143 = vld [vmem:[#allocation5 + $0xf0] sm:$0xff]
    %v144 = vld [vmem:[#allocation5 + $0xf8] sm:$0xff]
    %v145 = vld [vmem:[#allocation7] sm:$0xff]
    %v146 = vld [vmem:[#allocation7 + $0x8] sm:$0xff]
    %v147 = vld [vmem:[#allocation7 + $0x10] sm:$0xff]
    %v148 = vld [vmem:[#allocation7 + $0x18] sm:$0xff]
    %v149 = vld [vmem:[#allocation7 + $0x20] sm:$0xff]
    %v150 = vld [vmem:[#allocation7 + $0x28] sm:$0xff]
    %v151 = vld [vmem:[#allocation7 + $0x30] sm:$0xff]
    %v152 = vld [vmem:[#allocation7 + $0x38] sm:$0xff]
    %v153 = vld [vmem:[#allocation7 + $0x40] sm:$0xff]
    %v154 = vld [vmem:[#allocation7 + $0x48] sm:$0xff]
    %v155 = vld [vmem:[#allocation7 + $0x50] sm:$0xff]
    %v156 = vld [vmem:[#allocation7 + $0x58] sm:$0xff]
    %v157 = vld [vmem:[#allocation7 + $0x60] sm:$0xff]
    %v158 = vld [vmem:[#allocation7 + $0x68] sm:$0xff]
    %v159 = vld [vmem:[#allocation7 + $0x70] sm:$0xff]
    %v160 = vld [vmem:[#allocation7 + $0x78] sm:$0xff]
    %v161 = vld [vmem:[#allocation7 + $0x80] sm:$0xff]
    %v162 = vld [vmem:[#allocation7 + $0x88] sm:$0xff]
    %v163 = vld [vmem:[#allocation7 + $0x90] sm:$0xff]
    %v164 = vld [vmem:[#allocation7 + $0x98] sm:$0xff]
    %v165 = vld [vmem:[#allocation7 + $0xa0] sm:$0xff]
    %v166 = vld [vmem:[#allocation7 + $0xa8] sm:$0xff]
    %v167 = vld [vmem:[#allocation7 + $0xb0] sm:$0xff]
    %v168 = vld [vmem:[#allocation7 + $0xb8] sm:$0xff]
    %v169 = vld [vmem:[#allocation7 + $0xc0] sm:$0xff]
    %v170 = vld [vmem:[#allocation7 + $0xc8] sm:$0xff]
    %v171 = vld [vmem:[#allocation7 + $0xd0] sm:$0xff]
    %v172 = vld [vmem:[#allocation7 + $0xd8] sm:$0xff]
    %v173 = vld [vmem:[#allocation7 + $0xe0] sm:$0xff]
    %v174 = vld [vmem:[#allocation7 + $0xe8] sm:$0xff]
    %v175 = vld [vmem:[#allocation7 + $0xf0] sm:$0xff]
    %v176 = vld [vmem:[#allocation7 + $0xf8] sm:$0xff]
    %v178 = vperm.slane %v95, 0
    %v179 = vperm.slane %v95, 4
    %v182 = vperm.slane %v178, 0
    %v183 = vperm.slane %v179, 0
    %184 = vmatpush.msra.mxu0 %v143
    %185 = vmatpush.msra.mxu0 %v141
    %186 = vmatpush.msra.mxu0 %v139
    %187 = vmatpush.msra.mxu0 %v137
    %188 = vmatpush.msra.mxu0 %v135
    %189 = vmatpush.msra.mxu0 %v133
    %190 = vmatpush.msra.mxu0 %v131
    %191 = vmatpush.msra.mxu0 %v129
    %192 = vmatpush.msra.mxu0 %v127
    %193 = vmatpush.msra.mxu0 %v125
    %194 = vmatpush.msra.mxu0 %v123
    %195 = vmatpush.msra.mxu0 %v121
    %196 = vmatpush.msra.mxu0 %v119
    %197 = vmatpush.msra.mxu0 %v117
    %198 = vmatpush.msra.mxu0 %v115
    %199 = vmatpush.msra.mxu0 %v113
    %200 = vmatmul.f32.gmra.mxu0 %v112
    %v201 = vpop.f32.mrf.mxu0
    %v202 = vadd.f32 %v182, %v201
    %203 = vdwg.mxu0
    %204 = vmatpush.msra.mxu0 %v144
    %205 = vmatpush.msra.mxu0 %v142
    %206 = vmatpush.msra.mxu0 %v140
    %207 = vmatpush.msra.mxu0 %v138
    %208 = vmatpush.msra.mxu0 %v136
    %209 = vmatpush.msra.mxu0 %v134
    %210 = vmatpush.msra.mxu0 %v132
    %211 = vmatpush.msra.mxu0 %v130
    %212 = vmatpush.msra.mxu0 %v128
    %213 = vmatpush.msra.mxu0 %v126
    %214 = vmatpush.msra.mxu0 %v124
    %215 = vmatpush.msra.mxu0 %v122
    %216 = vmatpush.msra.mxu0 %v120
    %217 = vmatpush.msra.mxu0 %v118
    %218 = vmatpush.msra.mxu0 %v116
    %219 = vmatpush.msra.mxu0 %v114
    %220 = vmatmul.f32.gmra.mxu0 %v112
    %v221 = vpop.f32.mrf.mxu0
    %v222 = vadd.f32 %v183, %v221
    %223 = vdwg.mxu0
    %v224 = vmax.f32 %v202, 0.0
    %v225 = vmax.f32 %v222, 0.0
    %v226 = vperm.slane %v95, 1
    %227 = vmatpush.msra.mxu0 %v160
    %228 = vmatpush.msra.mxu0 %v159
    %229 = vmatpush.msra.mxu0 %v158
    %230 = vmatpush.msra.mxu0 %v157
    %231 = vmatpush.msra.mxu0 %v156
    %232 = vmatpush.msra.mxu0 %v155
    %233 = vmatpush.msra.mxu0 %v154
    %234 = vmatpush.msra.mxu0 %v153
    %235 = vmatpush.msra.mxu0 %v152
    %236 = vmatpush.msra.mxu0 %v151
    %237 = vmatpush.msra.mxu0 %v150
    %238 = vmatpush.msra.mxu0 %v149
    %239 = vmatpush.msra.mxu0 %v148
    %240 = vmatpush.msra.mxu0 %v147
    %241 = vmatpush.msra.mxu0 %v146
    %242 = vmatpush.msra.mxu0 %v145
    %243 = vmatmul.f32.gmra.mxu0 %v224
    %v244 = vpop.f32.mrf.mxu0
    %v245 = vadd.f32 %v226, %v244
    %246 = vdwg.mxu0
    %247 = vmatpush.msra.mxu0 %v176
    %248 = vmatpush.msra.mxu0 %v175
    %249 = vmatpush.msra.mxu0 %v174
    %250 = vmatpush.msra.mxu0 %v173
    %251 = vmatpush.msra.mxu0 %v172
    %252 = vmatpush.msra.mxu0 %v171
    %253 = vmatpush.msra.mxu0 %v170
    %254 = vmatpush.msra.mxu0 %v169
    %255 = vmatpush.msra.mxu0 %v168
    %256 = vmatpush.msra.mxu0 %v167
    %257 = vmatpush.msra.mxu0 %v166
    %258 = vmatpush.msra.mxu0 %v165
    %259 = vmatpush.msra.mxu0 %v164
    %260 = vmatpush.msra.mxu0 %v163
    %261 = vmatpush.msra.mxu0 %v162
    %262 = vmatpush.msra.mxu0 %v161
    %263 = vmatmul.f32.gmra.mxu0 %v225
    %v264 = vpop.f32.mrf.mxu0
    %v265 = vadd.f32 %v245, %v264
    %266 = vdwg.mxu0
    %v267 = vadd.f32 %v265, %v112
    %v268 = vand.u32 %v111, 4294901760
    %269 = vmatpush.msra.mxu0 %v268
    %v270 = vand.u32 %v110, 4294901760
    %271 = vmatpush.msra.mxu0 %v270
    %v272 = vand.u32 %v109, 4294901760
    %273 = vmatpush.msra.mxu0 %v272
    %v274 = vand.u32 %v108, 4294901760
    %275 = vmatpush.msra.mxu0 %v274
    %v276 = vand.u32 %v107, 4294901760
    %277 = vmatpush.msra.mxu0 %v276
    %v278 = vand.u32 %v106, 4294901760
    %279 = vmatpush.msra.mxu0 %v278
    %v280 = vand.u32 %v105, 4294901760
    %281 = vmatpush.msra.mxu0 %v280
    %v282 = vand.u32 %v104, 4294901760
    %283 = vmatpush.msra.mxu0 %v282
    %v284 = vand.u32 %v103, 4294901760
    %285 = vmatpush.msra.mxu0 %v284
    %v286 = vand.u32 %v102, 4294901760
    %287 = vmatpush.msra.mxu0 %v286
    %v288 = vand.u32 %v101, 4294901760
    %289 = vmatpush.msra.mxu0 %v288
    %v290 = vand.u32 %v100, 4294901760
    %291 = vmatpush.msra.mxu0 %v290
    %v292 = vand.u32 %v99, 4294901760
    %293 = vmatpush.msra.mxu0 %v292
    %v294 = vand.u32 %v98, 4294901760
    %295 = vmatpush.msra.mxu0 %v294
    %v296 = vand.u32 %v97, 4294901760
    %297 = vmatpush.msra.mxu0 %v296
    %v298 = vand.u32 %v96, 4294901760
    %299 = vmatpush.msra.mxu0 %v298
    %v300 = vand.u32 %v267, 4294901760
    %v301 = vsub.f32 %v267, %v300
    %v302 = vand.u32 %v301, 4294901760
    %v303 = vsub.f32 %v301, %v302
    %v304 = vand.u32 %v303, 4294901760
    %305 = vmatmul.f32.gmra.mxu0 %v304
    %v306 = vpop.f32.mrf.mxu0
    %v307 = vadd.f32 0.0, %v306
    %308 = vdwg.mxu0
    %v309 = vand.u32 %v111, 4294901760
    %v310 = vsub.f32 %v111, %v309
    %v311 = vand.u32 %v310, 4294901760
    %v312 = vsub.f32 %v310, %v311
    %v313 = vand.u32 %v312, 4294901760
    %314 = vmatpush.msra.mxu0 %v313
    %v315 = vand.u32 %v110, 4294901760
    %v316 = vsub.f32 %v110, %v315
    %v317 = vand.u32 %v316, 4294901760
    %v318 = vsub.f32 %v316, %v317
    %v319 = vand.u32 %v318, 4294901760
    %320 = vmatpush.msra.mxu0 %v319
    %v321 = vand.u32 %v109, 4294901760
    %v322 = vsub.f32 %v109, %v321
    %v323 = vand.u32 %v322, 4294901760
    %v324 = vsub.f32 %v322, %v323
    %v325 = vand.u32 %v324, 4294901760
    %326 = vmatpush.msra.mxu0 %v325
    %v327 = vand.u32 %v108, 4294901760
    %v328 = vsub.f32 %v108, %v327
    %v329 = vand.u32 %v328, 4294901760
    %v330 = vsub.f32 %v328, %v329
    %v331 = vand.u32 %v330, 4294901760
    %332 = vmatpush.msra.mxu0 %v331
    %v333 = vand.u32 %v107, 4294901760
    %v334 = vsub.f32 %v107, %v333
    %v335 = vand.u32 %v334, 4294901760
    %v336 = vsub.f32 %v334, %v335
    %v337 = vand.u32 %v336, 4294901760
    %338 = vmatpush.msra.mxu0 %v337
    %v339 = vand.u32 %v106, 4294901760
    %v340 = vsub.f32 %v106, %v339
    %v341 = vand.u32 %v340, 4294901760
    %v342 = vsub.f32 %v340, %v341
    %v343 = vand.u32 %v342, 4294901760
    %344 = vmatpush.msra.mxu0 %v343
    %v345 = vand.u32 %v105, 4294901760
    %v346 = vsub.f32 %v105, %v345
    %v347 = vand.u32 %v346, 4294901760
    %v348 = vsub.f32 %v346, %v347
    %v349 = vand.u32 %v348, 4294901760
    %350 = vmatpush.msra.mxu0 %v349
    %v351 = vand.u32 %v104, 4294901760
    %v352 = vsub.f32 %v104, %v351
    %v353 = vand.u32 %v352, 4294901760
    %v354 = vsub.f32 %v352, %v353
    %v355 = vand.u32 %v354, 4294901760
    %356 = vmatpush.msra.mxu0 %v355
    %v357 = vand.u32 %v103, 4294901760
    %v358 = vsub.f32 %v103, %v357
    %v359 = vand.u32 %v358, 4294901760
    %v360 = vsub.f32 %v358, %v359
    %v361 = vand.u32 %v360, 4294901760
    %362 = vmatpush.msra.mxu0 %v361
    %v363 = vand.u32 %v102, 4294901760
    %v364 = vsub.f32 %v102, %v363
    %v365 = vand.u32 %v364, 4294901760
    %v366 = vsub.f32 %v364, %v365
    %v367 = vand.u32 %v366, 4294901760
    %368 = vmatpush.msra.mxu0 %v367
    %v369 = vand.u32 %v101, 4294901760
    %v370 = vsub.f32 %v101, %v369
    %v371 = vand.u32 %v370, 4294901760
    %v372 = vsub.f32 %v370, %v371
    %v373 = vand.u32 %v372, 4294901760
    %374 = vmatpush.msra.mxu0 %v373
    %v375 = vand.u32 %v100, 4294901760
    %v376 = vsub.f32 %v100, %v375
    %v377 = vand.u32 %v376, 4294901760
    %v378 = vsub.f32 %v376, %v377
    %v379 = vand.u32 %v378, 4294901760
    %380 = vmatpush.msra.mxu0 %v379
    %v381 = vand.u32 %v99, 4294901760
    %v382 = vsub.f32 %v99, %v381
    %v383 = vand.u32 %v382, 4294901760
    %v384 = vsub.f32 %v382, %v383
    %v385 = vand.u32 %v384, 4294901760
    %386 = vmatpush.msra.mxu0 %v385
    %v387 = vand.u32 %v98, 4294901760
    %v388 = vsub.f32 %v98, %v387
    %v389 = vand.u32 %v388, 4294901760
    %v390 = vsub.f32 %v388, %v389
    %v391 = vand.u32 %v390, 4294901760
    %392 = vmatpush.msra.mxu0 %v391
    %v393 = vand.u32 %v97, 4294901760
    %v394 = vsub.f32 %v97, %v393
    %v395 = vand.u32 %v394, 4294901760
    %v396 = vsub.f32 %v394, %v395
    %v397 = vand.u32 %v396, 4294901760
    %398 = vmatpush.msra.mxu0 %v397
    %v399 = vand.u32 %v96, 4294901760
    %v400 = vsub.f32 %v96, %v399
    %v401 = vand.u32 %v400, 4294901760
    %v402 = vsub.f32 %v400, %v401
    %v403 = vand.u32 %v402, 4294901760
    %404 = vmatpush.msra.mxu0 %v403
    %v405 = vand.u32 %v267, 4294901760
    %406 = vmatmul.f32.gmra.mxu0 %v405
    %v407 = vpop.f32.mrf.mxu0
    %v408 = vadd.f32 %v307, %v407
    %409 = vdwg.mxu0
    %v410 = vand.u32 %v111, 4294901760
    %v411 = vsub.f32 %v111, %v410
    %412 = vmatpush.msra.mxu0 %v411
    %v413 = vand.u32 %v110, 4294901760
    %v414 = vsub.f32 %v110, %v413
    %415 = vmatpush.msra.mxu0 %v414
    %v416 = vand.u32 %v109, 4294901760
    %v417 = vsub.f32 %v109, %v416
    %418 = vmatpush.msra.mxu0 %v417
    %v419 = vand.u32 %v108, 4294901760
    %v420 = vsub.f32 %v108, %v419
    %421 = vmatpush.msra.mxu0 %v420
    %v422 = vand.u32 %v107, 4294901760
    %v423 = vsub.f32 %v107, %v422
    %424 = vmatpush.msra.mxu0 %v423
    %v425 = vand.u32 %v106, 4294901760
    %v426 = vsub.f32 %v106, %v425
    %427 = vmatpush.msra.mxu0 %v426
    %v428 = vand.u32 %v105, 4294901760
    %v429 = vsub.f32 %v105, %v428
    %430 = vmatpush.msra.mxu0 %v429
    %v431 = vand.u32 %v104, 4294901760
    %v432 = vsub.f32 %v104, %v431
    %433 = vmatpush.msra.mxu0 %v432
    %v434 = vand.u32 %v103, 4294901760
    %v435 = vsub.f32 %v103, %v434
    %436 = vmatpush.msra.mxu0 %v435
    %v437 = vand.u32 %v102, 4294901760
    %v438 = vsub.f32 %v102, %v437
    %439 = vmatpush.msra.mxu0 %v438
    %v440 = vand.u32 %v101, 4294901760
    %v441 = vsub.f32 %v101, %v440
    %442 = vmatpush.msra.mxu0 %v441
    %v443 = vand.u32 %v100, 4294901760
    %v444 = vsub.f32 %v100, %v443
    %445 = vmatpush.msra.mxu0 %v444
    %v446 = vand.u32 %v99, 4294901760
    %v447 = vsub.f32 %v99, %v446
    %448 = vmatpush.msra.mxu0 %v447
    %v449 = vand.u32 %v98, 4294901760
    %v450 = vsub.f32 %v98, %v449
    %451 = vmatpush.msra.mxu0 %v450
    %v452 = vand.u32 %v97, 4294901760
    %v453 = vsub.f32 %v97, %v452
    %454 = vmatpush.msra.mxu0 %v453
    %v455 = vand.u32 %v96, 4294901760
    %v456 = vsub.f32 %v96, %v455
    %457 = vmatpush.msra.mxu0 %v456
    %v458 = vand.u32 %v267, 4294901760
    %v459 = vsub.f32 %v267, %v458
    %460 = vmatmul.f32.gmra.mxu0 %v459
    %v461 = vpop.f32.mrf.mxu0
    %v462 = vadd.f32 %v408, %v461
    %463 = vdwg.mxu0
    %v464 = vand.u32 %v111, 4294901760
    %465 = vmatpush.msra.mxu0 %v464
    %v466 = vand.u32 %v110, 4294901760
    %467 = vmatpush.msra.mxu0 %v466
    %v468 = vand.u32 %v109, 4294901760
    %469 = vmatpush.msra.mxu0 %v468
    %v470 = vand.u32 %v108, 4294901760
    %471 = vmatpush.msra.mxu0 %v470
    %v472 = vand.u32 %v107, 4294901760
    %473 = vmatpush.msra.mxu0 %v472
    %v474 = vand.u32 %v106, 4294901760
    %475 = vmatpush.msra.mxu0 %v474
    %v476 = vand.u32 %v105, 4294901760
    %477 = vmatpush.msra.mxu0 %v476
    %v478 = vand.u32 %v104, 4294901760
    %479 = vmatpush.msra.mxu0 %v478
    %v480 = vand.u32 %v103, 4294901760
    %481 = vmatpush.msra.mxu0 %v480
    %v482 = vand.u32 %v102, 4294901760
    %483 = vmatpush.msra.mxu0 %v482
    %v484 = vand.u32 %v101, 4294901760
    %485 = vmatpush.msra.mxu0 %v484
    %v486 = vand.u32 %v100, 4294901760
    %487 = vmatpush.msra.mxu0 %v486
    %v488 = vand.u32 %v99, 4294901760
    %489 = vmatpush.msra.mxu0 %v488
    %v490 = vand.u32 %v98, 4294901760
    %491 = vmatpush.msra.mxu0 %v490
    %v492 = vand.u32 %v97, 4294901760
    %493 = vmatpush.msra.mxu0 %v492
    %v494 = vand.u32 %v96, 4294901760
    %495 = vmatpush.msra.mxu0 %v494
    %v496 = vand.u32 %v267, 4294901760
    %v497 = vsub.f32 %v267, %v496
    %v498 = vand.u32 %v497, 4294901760
    %499 = vmatmul.f32.gmra.mxu0 %v498
    %v500 = vpop.f32.mrf.mxu0
    %v501 = vadd.f32 %v462, %v500
    %502 = vdwg.mxu0
    %v503 = vand.u32 %v111, 4294901760
    %v504 = vsub.f32 %v111, %v503
    %v505 = vand.u32 %v504, 4294901760
    %506 = vmatpush.msra.mxu0 %v505
    %v507 = vand.u32 %v110, 4294901760
    %v508 = vsub.f32 %v110, %v507
    %v509 = vand.u32 %v508, 4294901760
    %510 = vmatpush.msra.mxu0 %v509
    %v511 = vand.u32 %v109, 4294901760
    %v512 = vsub.f32 %v109, %v511
    %v513 = vand.u32 %v512, 4294901760
    %514 = vmatpush.msra.mxu0 %v513
    %v515 = vand.u32 %v108, 4294901760
    %v516 = vsub.f32 %v108, %v515
    %v517 = vand.u32 %v516, 4294901760
    %518 = vmatpush.msra.mxu0 %v517
    %v519 = vand.u32 %v107, 4294901760
    %v520 = vsub.f32 %v107, %v519
    %v521 = vand.u32 %v520, 4294901760
    %522 = vmatpush.msra.mxu0 %v521
    %v523 = vand.u32 %v106, 4294901760
    %v524 = vsub.f32 %v106, %v523
    %v525 = vand.u32 %v524, 4294901760
    %526 = vmatpush.msra.mxu0 %v525
    %v527 = vand.u32 %v105, 4294901760
    %v528 = vsub.f32 %v105, %v527
    %v529 = vand.u32 %v528, 4294901760
    %530 = vmatpush.msra.mxu0 %v529
    %v531 = vand.u32 %v104, 4294901760
    %v532 = vsub.f32 %v104, %v531
    %v533 = vand.u32 %v532, 4294901760
    %534 = vmatpush.msra.mxu0 %v533
    %v535 = vand.u32 %v103, 4294901760
    %v536 = vsub.f32 %v103, %v535
    %v537 = vand.u32 %v536, 4294901760
    %538 = vmatpush.msra.mxu0 %v537
    %v539 = vand.u32 %v102, 4294901760
    %v540 = vsub.f32 %v102, %v539
    %v541 = vand.u32 %v540, 4294901760
    %542 = vmatpush.msra.mxu0 %v541
    %v543 = vand.u32 %v101, 4294901760
    %v544 = vsub.f32 %v101, %v543
    %v545 = vand.u32 %v544, 4294901760
    %546 = vmatpush.msra.mxu0 %v545
    %v547 = vand.u32 %v100, 4294901760
    %v548 = vsub.f32 %v100, %v547
    %v549 = vand.u32 %v548, 4294901760
    %550 = vmatpush.msra.mxu0 %v549
    %v551 = vand.u32 %v99, 4294901760
    %v552 = vsub.f32 %v99, %v551
    %v553 = vand.u32 %v552, 4294901760
    %554 = vmatpush.msra.mxu0 %v553
    %v555 = vand.u32 %v98, 4294901760
    %v556 = vsub.f32 %v98, %v555
    %v557 = vand.u32 %v556, 4294901760
    %558 = vmatpush.msra.mxu0 %v557
    %v559 = vand.u32 %v97, 4294901760
    %v560 = vsub.f32 %v97, %v559
    %v561 = vand.u32 %v560, 4294901760
    %562 = vmatpush.msra.mxu0 %v561
    %v563 = vand.u32 %v96, 4294901760
    %v564 = vsub.f32 %v96, %v563
    %v565 = vand.u32 %v564, 4294901760
    %566 = vmatpush.msra.mxu0 %v565
    %v567 = vand.u32 %v267, 4294901760
    %568 = vmatmul.f32.gmra.mxu0 %v567
    %v569 = vpop.f32.mrf.mxu0
    %v570 = vadd.f32 %v501, %v569
    %571 = vdwg.mxu0
    %v572 = vand.u32 %v111, 4294901760
    %573 = vmatpush.msra.mxu0 %v572
    %v574 = vand.u32 %v110, 4294901760
    %575 = vmatpush.msra.mxu0 %v574
    %v576 = vand.u32 %v109, 4294901760
    %577 = vmatpush.msra.mxu0 %v576
    %v578 = vand.u32 %v108, 4294901760
    %579 = vmatpush.msra.mxu0 %v578
    %v580 = vand.u32 %v107, 4294901760
    %581 = vmatpush.msra.mxu0 %v580
    %v582 = vand.u32 %v106, 4294901760
    %583 = vmatpush.msra.mxu0 %v582
    %v584 = vand.u32 %v105, 4294901760
    %585 = vmatpush.msra.mxu0 %v584
    %v586 = vand.u32 %v104, 4294901760
    %587 = vmatpush.msra.mxu0 %v586
    %v588 = vand.u32 %v103, 4294901760
    %589 = vmatpush.msra.mxu0 %v588
    %v590 = vand.u32 %v102, 4294901760
    %591 = vmatpush.msra.mxu0 %v590
    %v592 = vand.u32 %v101, 4294901760
    %593 = vmatpush.msra.mxu0 %v592
    %v594 = vand.u32 %v100, 4294901760
    %595 = vmatpush.msra.mxu0 %v594
    %v596 = vand.u32 %v99, 4294901760
    %597 = vmatpush.msra.mxu0 %v596
    %v598 = vand.u32 %v98, 4294901760
    %599 = vmatpush.msra.mxu0 %v598
    %v600 = vand.u32 %v97, 4294901760
    %601 = vmatpush.msra.mxu0 %v600
    %v602 = vand.u32 %v96, 4294901760
    %603 = vmatpush.msra.mxu0 %v602
    %v604 = vand.u32 %v267, 4294901760
    %605 = vmatmul.f32.gmra.mxu0 %v604
    %v606 = vpop.f32.mrf.mxu0
    %v607 = vadd.f32 %v570, %v606
    %608 = vdwg.mxu0
    %v609 = vsub.f32 %v267, %v607
    %v610 = vmul.f32 %v609, %v609
    %v611 = vand.u32 %v111, 4294901760
    %612 = vmatpush.msra.mxu0 %v611
    %v613 = vand.u32 %v110, 4294901760
    %614 = vmatpush.msra.mxu0 %v613
    %v615 = vand.u32 %v109, 4294901760
    %616 = vmatpush.msra.mxu0 %v615
    %v617 = vand.u32 %v108, 4294901760
    %618 = vmatpush.msra.mxu0 %v617
    %v619 = vand.u32 %v107, 4294901760
    %620 = vmatpush.msra.mxu0 %v619
    %v621 = vand.u32 %v106, 4294901760
    %622 = vmatpush.msra.mxu0 %v621
    %v623 = vand.u32 %v105, 4294901760
    %624 = vmatpush.msra.mxu0 %v623
    %v625 = vand.u32 %v104, 4294901760
    %626 = vmatpush.msra.mxu0 %v625
    %v627 = vand.u32 %v103, 4294901760
    %628 = vmatpush.msra.mxu0 %v627
    %v629 = vand.u32 %v102, 4294901760
    %630 = vmatpush.msra.mxu0 %v629
    %v631 = vand.u32 %v101, 4294901760
    %632 = vmatpush.msra.mxu0 %v631
    %v633 = vand.u32 %v100, 4294901760
    %634 = vmatpush.msra.mxu0 %v633
    %v635 = vand.u32 %v99, 4294901760
    %636 = vmatpush.msra.mxu0 %v635
    %v637 = vand.u32 %v98, 4294901760
    %638 = vmatpush.msra.mxu0 %v637
    %v639 = vand.u32 %v97, 4294901760
    %640 = vmatpush.msra.mxu0 %v639
    %v641 = vand.u32 %v96, 4294901760
    %642 = vmatpush.msra.mxu0 %v641
    %v643 = vand.u32 %v610, 4294901760
    %v644 = vsub.f32 %v610, %v643
    %v645 = vand.u32 %v644, 4294901760
    %v646 = vsub.f32 %v644, %v645
    %v647 = vand.u32 %v646, 4294901760
    %648 = vmatmul.f32.gmra.mxu0 %v647
    %v649 = vpop.f32.mrf.mxu0
    %v650 = vadd.f32 1e-05, %v649
    %651 = vdwg.mxu0
    %v652 = vand.u32 %v111, 4294901760
    %v653 = vsub.f32 %v111, %v652
    %v654 = vand.u32 %v653, 4294901760
    %v655 = vsub.f32 %v653, %v654
    %v656 = vand.u32 %v655, 4294901760
    %657 = vmatpush.msra.mxu0 %v656
    %v658 = vand.u32 %v110, 4294901760
    %v659 = vsub.f32 %v110, %v658
    %v660 = vand.u32 %v659, 4294901760
    %v661 = vsub.f32 %v659, %v660
    %v662 = vand.u32 %v661, 4294901760
    %663 = vmatpush.msra.mxu0 %v662
    %v664 = vand.u32 %v109, 4294901760
    %v665 = vsub.f32 %v109, %v664
    %v666 = vand.u32 %v665, 4294901760
    %v667 = vsub.f32 %v665, %v666
    %v668 = vand.u32 %v667, 4294901760
    %669 = vmatpush.msra.mxu0 %v668
    %v670 = vand.u32 %v108, 4294901760
    %v671 = vsub.f32 %v108, %v670
    %v672 = vand.u32 %v671, 4294901760
    %v673 = vsub.f32 %v671, %v672
    %v674 = vand.u32 %v673, 4294901760
    %675 = vmatpush.msra.mxu0 %v674
    %v676 = vand.u32 %v107, 4294901760
    %v677 = vsub.f32 %v107, %v676
    %v678 = vand.u32 %v677, 4294901760
    %v679 = vsub.f32 %v677, %v678
    %v680 = vand.u32 %v679, 4294901760
    %681 = vmatpush.msra.mxu0 %v680
    %v682 = vand.u32 %v106, 4294901760
    %v683 = vsub.f32 %v106, %v682
    %v684 = vand.u32 %v683, 4294901760
    %v685 = vsub.f32 %v683, %v684
    %v686 = vand.u32 %v685, 4294901760
    %687 = vmatpush.msra.mxu0 %v686
    %v688 = vand.u32 %v105, 4294901760
    %v689 = vsub.f32 %v105, %v688
    %v690 = vand.u32 %v689, 4294901760
    %v691 = vsub.f32 %v689, %v690
    %v692 = vand.u32 %v691, 4294901760
    %693 = vmatpush.msra.mxu0 %v692
    %v694 = vand.u32 %v104, 4294901760
    %v695 = vsub.f32 %v104, %v694
    %v696 = vand.u32 %v695, 4294901760
    %v697 = vsub.f32 %v695, %v696
    %v698 = vand.u32 %v697, 4294901760
    %699 = vmatpush.msra.mxu0 %v698
    %v700 = vand.u32 %v103, 4294901760
    %v701 = vsub.f32 %v103, %v700
    %v702 = vand.u32 %v701, 4294901760
    %v703 = vsub.f32 %v701, %v702
    %v704 = vand.u32 %v703, 4294901760
    %705 = vmatpush.msra.mxu0 %v704
    %v706 = vand.u32 %v102, 4294901760
    %v707 = vsub.f32 %v102, %v706
    %v708 = vand.u32 %v707, 4294901760
    %v709 = vsub.f32 %v707, %v708
    %v710 = vand.u32 %v709, 4294901760
    %711 = vmatpush.msra.mxu0 %v710
    %v712 = vand.u32 %v101, 4294901760
    %v713 = vsub.f32 %v101, %v712
    %v714 = vand.u32 %v713, 4294901760
    %v715 = vsub.f32 %v713, %v714
    %v716 = vand.u32 %v715, 4294901760
    %717 = vmatpush.msra.mxu0 %v716
    %v718 = vand.u32 %v100, 4294901760
    %v719 = vsub.f32 %v100, %v718
    %v720 = vand.u32 %v719, 4294901760
    %v721 = vsub.f32 %v719, %v720
    %v722 = vand.u32 %v721, 4294901760
    %723 = vmatpush.msra.mxu0 %v722
    %v724 = vand.u32 %v99, 4294901760
    %v725 = vsub.f32 %v99, %v724
    %v726 = vand.u32 %v725, 4294901760
    %v727 = vsub.f32 %v725, %v726
    %v728 = vand.u32 %v727, 4294901760
    %729 = vmatpush.msra.mxu0 %v728
    %v730 = vand.u32 %v98, 4294901760
    %v731 = vsub.f32 %v98, %v730
    %v732 = vand.u32 %v731, 4294901760
    %v733 = vsub.f32 %v731, %v732
    %v734 = vand.u32 %v733, 4294901760
    %735 = vmatpush.msra.mxu0 %v734
    %v736 = vand.u32 %v97, 4294901760
    %v737 = vsub.f32 %v97, %v736
    %v738 = vand.u32 %v737, 4294901760
    %v739 = vsub.f32 %v737, %v738
    %v740 = vand.u32 %v739, 4294901760
    %741 = vmatpush.msra.mxu0 %v740
    %v742 = vand.u32 %v96, 4294901760
    %v743 = vsub.f32 %v96, %v742
    %v744 = vand.u32 %v743, 4294901760
    %v745 = vsub.f32 %v743, %v744
    %v746 = vand.u32 %v745, 4294901760
    %747 = vmatpush.msra.mxu0 %v746
    %v748 = vand.u32 %v610, 4294901760
    %749 = vmatmul.f32.gmra.mxu0 %v748
    %v750 = vpop.f32.mrf.mxu0
    %v751 = vadd.f32 %v650, %v750
    %752 = vdwg.mxu0
    %v753 = vand.u32 %v111, 4294901760
    %v754 = vsub.f32 %v111, %v753
    %755 = vmatpush.msra.mxu0 %v754
    %v756 = vand.u32 %v110, 4294901760
    %v757 = vsub.f32 %v110, %v756
    %758 = vmatpush.msra.mxu0 %v757
    %v759 = vand.u32 %v109, 4294901760
    %v760 = vsub.f32 %v109, %v759
    %761 = vmatpush.msra.mxu0 %v760
    %v762 = vand.u32 %v108, 4294901760
    %v763 = vsub.f32 %v108, %v762
    %764 = vmatpush.msra.mxu0 %v763
    %v765 = vand.u32 %v107, 4294901760
    %v766 = vsub.f32 %v107, %v765
    %767 = vmatpush.msra.mxu0 %v766
    %v768 = vand.u32 %v106, 4294901760
    %v769 = vsub.f32 %v106, %v768
    %770 = vmatpush.msra.mxu0 %v769
    %v771 = vand.u32 %v105, 4294901760
    %v772 = vsub.f32 %v105, %v771
    %773 = vmatpush.msra.mxu0 %v772
    %v774 = vand.u32 %v104, 4294901760
    %v775 = vsub.f32 %v104, %v774
    %776 = vmatpush.msra.mxu0 %v775
    %v777 = vand.u32 %v103, 4294901760
    %v778 = vsub.f32 %v103, %v777
    %779 = vmatpush.msra.mxu0 %v778
    %v780 = vand.u32 %v102, 4294901760
    %v781 = vsub.f32 %v102, %v780
    %782 = vmatpush.msra.mxu0 %v781
    %v783 = vand.u32 %v101, 4294901760
    %v784 = vsub.f32 %v101, %v783
    %785 = vmatpush.msra.mxu0 %v784
    %v786 = vand.u32 %v100, 4294901760
    %v787 = vsub.f32 %v100, %v786
    %788 = vmatpush.msra.mxu0 %v787
    %v789 = vand.u32 %v99, 4294901760
    %v790 = vsub.f32 %v99, %v789
    %791 = vmatpush.msra.mxu0 %v790
    %v792 = vand.u32 %v98, 4294901760
    %v793 = vsub.f32 %v98, %v792
    %794 = vmatpush.msra.mxu0 %v793
    %v795 = vand.u32 %v97, 4294901760
    %v796 = vsub.f32 %v97, %v795
    %797 = vmatpush.msra.mxu0 %v796
    %v798 = vand.u32 %v96, 4294901760
    %v799 = vsub.f32 %v96, %v798
    %800 = vmatpush.msra.mxu0 %v799
    %v801 = vand.u32 %v610, 4294901760
    %v802 = vsub.f32 %v610, %v801
    %803 = vmatmul.f32.gmra.mxu0 %v802
    %v804 = vpop.f32.mrf.mxu0
    %v805 = vadd.f32 %v751, %v804
    %806 = vdwg.mxu0
    %v807 = vand.u32 %v111, 4294901760
    %808 = vmatpush.msra.mxu0 %v807
    %v809 = vand.u32 %v110, 4294901760
    %810 = vmatpush.msra.mxu0 %v809
    %v811 = vand.u32 %v109, 4294901760
    %812 = vmatpush.msra.mxu0 %v811
    %v813 = vand.u32 %v108, 4294901760
    %814 = vmatpush.msra.mxu0 %v813
    %v815 = vand.u32 %v107, 4294901760
    %816 = vmatpush.msra.mxu0 %v815
    %v817 = vand.u32 %v106, 4294901760
    %818 = vmatpush.msra.mxu0 %v817
    %v819 = vand.u32 %v105, 4294901760
    %820 = vmatpush.msra.mxu0 %v819
    %v821 = vand.u32 %v104, 4294901760
    %822 = vmatpush.msra.mxu0 %v821
    %v823 = vand.u32 %v103, 4294901760
    %824 = vmatpush.msra.mxu0 %v823
    %v825 = vand.u32 %v102, 4294901760
    %826 = vmatpush.msra.mxu0 %v825
    %v827 = vand.u32 %v101, 4294901760
    %828 = vmatpush.msra.mxu0 %v827
    %v829 = vand.u32 %v100, 4294901760
    %830 = vmatpush.msra.mxu0 %v829
    %v831 = vand.u32 %v99, 4294901760
    %832 = vmatpush.msra.mxu0 %v831
    %v833 = vand.u32 %v98, 4294901760
    %834 = vmatpush.msra.mxu0 %v833
    %v835 = vand.u32 %v97, 4294901760
    %836 = vmatpush.msra.mxu0 %v835
    %v837 = vand.u32 %v96, 4294901760
    %838 = vmatpush.msra.mxu0 %v837
    %v839 = vand.u32 %v610, 4294901760
    %v840 = vsub.f32 %v610, %v839
    %v841 = vand.u32 %v840, 4294901760
    %842 = vmatmul.f32.gmra.mxu0 %v841
    %v843 = vpop.f32.mrf.mxu0
    %v844 = vadd.f32 %v805, %v843
    %845 = vdwg.mxu0
    %v846 = vand.u32 %v111, 4294901760
    %v847 = vsub.f32 %v111, %v846
    %v848 = vand.u32 %v847, 4294901760
    %849 = vmatpush.msra.mxu0 %v848
    %v850 = vand.u32 %v110, 4294901760
    %v851 = vsub.f32 %v110, %v850
    %v852 = vand.u32 %v851, 4294901760
    %853 = vmatpush.msra.mxu0 %v852
    %v854 = vand.u32 %v109, 4294901760
    %v855 = vsub.f32 %v109, %v854
    %v856 = vand.u32 %v855, 4294901760
    %857 = vmatpush.msra.mxu0 %v856
    %v858 = vand.u32 %v108, 4294901760
    %v859 = vsub.f32 %v108, %v858
    %v860 = vand.u32 %v859, 4294901760
    %861 = vmatpush.msra.mxu0 %v860
    %v862 = vand.u32 %v107, 4294901760
    %v863 = vsub.f32 %v107, %v862
    %v864 = vand.u32 %v863, 4294901760
    %865 = vmatpush.msra.mxu0 %v864
    %v866 = vand.u32 %v106, 4294901760
    %v867 = vsub.f32 %v106, %v866
    %v868 = vand.u32 %v867, 4294901760
    %869 = vmatpush.msra.mxu0 %v868
    %v870 = vand.u32 %v105, 4294901760
    %v871 = vsub.f32 %v105, %v870
    %v872 = vand.u32 %v871, 4294901760
    %873 = vmatpush.msra.mxu0 %v872
    %v874 = vand.u32 %v104, 4294901760
    %v875 = vsub.f32 %v104, %v874
    %v876 = vand.u32 %v875, 4294901760
    %877 = vmatpush.msra.mxu0 %v876
    %v878 = vand.u32 %v103, 4294901760
    %v879 = vsub.f32 %v103, %v878
    %v880 = vand.u32 %v879, 4294901760
    %881 = vmatpush.msra.mxu0 %v880
    %v882 = vand.u32 %v102, 4294901760
    %v883 = vsub.f32 %v102, %v882
    %v884 = vand.u32 %v883, 4294901760
    %885 = vmatpush.msra.mxu0 %v884
    %v886 = vand.u32 %v101, 4294901760
    %v887 = vsub.f32 %v101, %v886
    %v888 = vand.u32 %v887, 4294901760
    %889 = vmatpush.msra.mxu0 %v888
    %v890 = vand.u32 %v100, 4294901760
    %v891 = vsub.f32 %v100, %v890
    %v892 = vand.u32 %v891, 4294901760
    %893 = vmatpush.msra.mxu0 %v892
    %v894 = vand.u32 %v99, 4294901760
    %v895 = vsub.f32 %v99, %v894
    %v896 = vand.u32 %v895, 4294901760
    %897 = vmatpush.msra.mxu0 %v896
    %v898 = vand.u32 %v98, 4294901760
    %v899 = vsub.f32 %v98, %v898
    %v900 = vand.u32 %v899, 4294901760
    %901 = vmatpush.msra.mxu0 %v900
    %v902 = vand.u32 %v97, 4294901760
    %v903 = vsub.f32 %v97, %v902
    %v904 = vand.u32 %v903, 4294901760
    %905 = vmatpush.msra.mxu0 %v904
    %v906 = vand.u32 %v96, 4294901760
    %v907 = vsub.f32 %v96, %v906
    %v908 = vand.u32 %v907, 4294901760
    %909 = vmatpush.msra.mxu0 %v908
    %v910 = vand.u32 %v610, 4294901760
    %911 = vmatmul.f32.gmra.mxu0 %v910
    %v912 = vpop.f32.mrf.mxu0
    %v913 = vadd.f32 %v844, %v912
    %914 = vdwg.mxu0
    %v915 = vand.u32 %v111, 4294901760
    %916 = vmatpush.msra.mxu0 %v915
    %v917 = vand.u32 %v110, 4294901760
    %918 = vmatpush.msra.mxu0 %v917
    %v919 = vand.u32 %v109, 4294901760
    %920 = vmatpush.msra.mxu0 %v919
    %v921 = vand.u32 %v108, 4294901760
    %922 = vmatpush.msra.mxu0 %v921
    %v923 = vand.u32 %v107, 4294901760
    %924 = vmatpush.msra.mxu0 %v923
    %v925 = vand.u32 %v106, 4294901760
    %926 = vmatpush.msra.mxu0 %v925
    %v927 = vand.u32 %v105, 4294901760
    %928 = vmatpush.msra.mxu0 %v927
    %v929 = vand.u32 %v104, 4294901760
    %930 = vmatpush.msra.mxu0 %v929
    %v931 = vand.u32 %v103, 4294901760
    %932 = vmatpush.msra.mxu0 %v931
    %v933 = vand.u32 %v102, 4294901760
    %934 = vmatpush.msra.mxu0 %v933
    %v935 = vand.u32 %v101, 4294901760
    %936 = vmatpush.msra.mxu0 %v935
    %v937 = vand.u32 %v100, 4294901760
    %938 = vmatpush.msra.mxu0 %v937
    %v939 = vand.u32 %v99, 4294901760
    %940 = vmatpush.msra.mxu0 %v939
    %v941 = vand.u32 %v98, 4294901760
    %942 = vmatpush.msra.mxu0 %v941
    %v943 = vand.u32 %v97, 4294901760
    %944 = vmatpush.msra.mxu0 %v943
    %v945 = vand.u32 %v96, 4294901760
    %946 = vmatpush.msra.mxu0 %v945
    %v947 = vand.u32 %v610, 4294901760
    %948 = vmatmul.f32.gmra.mxu0 %v947
    %v949 = vpop.f32.mrf.mxu0
    %v950 = vadd.f32 %v913, %v949
    %951 = vdwg.mxu0
    %v952 = vrsqrt.pop %v950
    %v953 = vmul.f32 %v952, %v950
    %v954 = vmul.f32 %v953, %v952
    %v955 = vmul.f32 0.5, %v954
    %v956 = vsub.f32 1.5, %v955
    %v957 = vmul.f32 %v952, %v956
    %vm958 = vweird.f32 %v950
    %vm959 = vweird.f32 %v952
    %vm960 = vmor %vm958, %vm959
    %v961 = vsel %vm960, %v952, %v957
    %v962 = vmul.f32 %v609, %v961
    %v963 = vperm.slane %v95, 2
    %v964 = vmul.f32 %v962, %v963
    %v965 = vperm.slane %v95, 3
    %v966 = vadd.f32 %v964, %v965
    %967 = vst [vmem:[#allocation11] sm:$0x3] %v966
    // Predicated region
    $region42: #{tpu_custom_call.1} parent=1 // pred_check
      _
    $region43: #{tpu_custom_call.1} parent=1 // pred_check_branch
      %969 = sbr.rel (0) target = $region45
    $region44: #{tpu_custom_call.1} parent=1 // pred_region
      %971 = vsyncadd [#allocation4], 0
      %s973 = sshll.u32 [#allocation11], 4
      %s974 = int_to_ptr.vmem [resolvable:$true] %s973
      %s975 = sshll.u32 %s5, 4
      %s976 = int_to_ptr.hbm [resolvable:$true] %s975
      %978 = dma.vmem_to_hbm [thread:$0]  %s974, 32, %s976, [#allocation4]
    $region45: #{tpu_custom_call.1} parent=1 // pred_fallthru
      _
    // Predicated region
    $region46: #{tpu_custom_call.1} parent=1 // pred_check
      _
    $region47: #{tpu_custom_call.1} parent=1 // pred_check_branch
      %980 = sbr.rel (0) target = $region49
    $region48: #{tpu_custom_call.1} parent=1 // pred_region
      %982 = dma.done [#allocation4], 32
    $region49: #{tpu_custom_call.1} parent=1 // pred_fallthru
      _
    %983 = vsyncpa [#allocation3], 1
    %984 = vsyncpa [#allocation6], 1
    %985 = vsyncpa [#allocation9], 1
    %986 = vsyncpa [#allocation4], 1

</llo_original>
